<compile_context>
chip_gen: v7x
topology: tpu7x:2x2x1
jax: 0.10.0
libtpu: 0.0.40
codegen_flags: <defaults>
</compile_context>

<pallas_src>
import jax
import jax.numpy as jnp
from jax.experimental import pallas as pl
from jax.experimental.pallas import tpu as pltpu


def _round_up(x, m):
    return (x + m - 1) // m * m


def gru_fused_kernel(x_ref, len_ref, wih_ref, whh_ref, gbias_ref, bhn_ref,
                     wfc_ref, bfc_ref, out_ref, gi_ref):
    # x_ref   : (1, T*Bc, D)   bf16, time-major rows (t major, batch-row minor)
    # len_ref : (Bc, 1)        int32
    # wih_ref : (D, 3*Hp)      bf16   (gate blocks [r|z|n], each Hp wide)
    # whh_ref : (Hp, 3*Hp)     bf16
    # gbias_ref: (1, 3*Hp)     f32    (b_ih + b_hh for r,z ; b_ih only for n)
    # bhn_ref : (1, Hp)        f32    (b_hh of the n gate)
    # wfc_ref : (Hp, 128)      f32    (only column 0 is real)
    # bfc_ref : (1, 128)       f32
    # out_ref : (Bc, 128)      f32
    # gi_ref  : VMEM scratch (T*Bc, 3*Hp) f32
    tb, d = x_ref.shape[1], x_ref.shape[2]
    hp = whh_ref.shape[0]
    bc = len_ref.shape[0]
    t_steps = tb // bc

    # ---- Prologue: hoist the input projection out of the recurrence. -------
    # One big (T*Bc, D) x (D, 3Hp) matmul instead of T tiny per-step matmuls.
    x2d = x_ref[0]                                            # (T*Bc, D) bf16
    gi_ref[...] = (
        jnp.dot(x2d, wih_ref[...], preferred_element_type=jnp.float32)
        + gbias_ref[...])

    # Loop-invariant values (loaded once, live in vregs).
    len_col = len_ref[...]                                    # (Bc, 1) int32
    w_hh = whh_ref[...]                                       # (Hp, 3Hp) bf16
    b_hn = bhn_ref[...]                                       # (1, Hp) f32

    def step(t, h):
        # Aligned sublane slice of the precomputed input projections.
        row = pl.multiple_of(t * bc, bc)
        gi = gi_ref[pl.ds(row, bc), :]                        # (Bc, 3Hp) f32
        gh = jnp.dot(h.astype(w_hh.dtype), w_hh,
                     preferred_element_type=jnp.float32)      # (Bc, 3Hp) f32
        # 128-lane-aligned gate slices (Hp == 128 multiple) -> free slices.
        r = jax.nn.sigmoid(gi[:, :hp] + gh[:, :hp])
        z = jax.nn.sigmoid(gi[:, hp:2 * hp] + gh[:, hp:2 * hp])
        n = jnp.tanh(gi[:, 2 * hp:] + r * (gh[:, 2 * hp:] + b_hn))
        h_new = (1.0 - z) * n + z * h
        # pack_padded_sequence semantics: freeze h once t >= length[b].
        return jnp.where(len_col > t, h_new, h)

    h0 = jnp.zeros((bc, hp), jnp.float32)
    h_n = jax.lax.fori_loop(0, t_steps, step, h0, unroll=True)

    # Fused fc1 + sigmoid epilogue; lane-dense (Bc, 128) full-tile store.
    logit = jnp.dot(h_n, wfc_ref[...],
                    preferred_element_type=jnp.float32) + bfc_ref[...]
    out_ref[...] = jax.nn.sigmoid(logit)


def rnn_forward(tokens, lengths, params, *, batch_chunk=8):
    """tokens: (B, T) int32 ids, lengths: (B,) int32 valid lengths."""
    emb = params["embedding"]
    B, T = tokens.shape
    D = emb.shape[1]
    H = params["w_hh"].shape[0]                 # w_hh stored as (H, 3H)
    HP = _round_up(H, 128)                      # lane-aligned gate width
    BC = batch_chunk                            # sublane tile (>= 8)
    BP = _round_up(max(B, BC), BC)
    NC = BP // BC
    OUT_LANES = 128

    # ---- Embedding gather directly into the kernel layout. -----------------
    # Rearrange the tiny (B, T) token matrix (not the embedded activations) so
    # the gather output is already (chunks, T*Bc, D) time-major: no XLA-side
    # transpose / HBM round-trip of x.
    tok = tokens.astype(jnp.int32)
    tok_tm = jnp.pad(tok.T, ((0, 0), (0, BP - B)))            # (T, BP)
    tok_blk = tok_tm.reshape(T, NC, BC).transpose(1, 0, 2)    # (NC, T, BC)
    x = jnp.take(emb, tok_blk, axis=0)                        # (NC, T, BC, D)
    x = x.reshape(NC, T * BC, D).astype(jnp.bfloat16)

    # ---- Gate-padded, pre-transposed (in, out) weights. ---------------------
    def pad_gates(w):                                         # (in, 3H)->(in, 3*HP)
        w3 = w.reshape(w.shape[0], 3, H)
        w3 = jnp.pad(w3, ((0, 0), (0, 0), (0, HP - H)))
        return w3.reshape(w.shape[0], 3 * HP)

    w_ih_p = pad_gates(params["w_ih"]).astype(jnp.bfloat16)                  # (D, 3HP)
    w_hh_p = jnp.pad(pad_gates(params["w_hh"]),
                     ((0, HP - H), (0, 0))).astype(jnp.bfloat16)             # (HP, 3HP)

    b_ih = params["b_ih"].reshape(3, H)
    b_hh = params["b_hh"].reshape(3, H)
    # Fold b_hh[r], b_hh[z] into the precomputed input-side bias; keep b_hh[n]
    # separate (it must stay inside the r*(...) term to match PyTorch GRU).
    gbias = jnp.stack([b_ih[0] + b_hh[0], b_ih[1] + b_hh[1], b_ih[2]], axis=0)
    gbias = jnp.pad(gbias, ((0, 0), (0, HP - H))).reshape(1, 3 * HP)
    gbias = gbias.astype(jnp.float32)
    b_hn = jnp.pad(b_hh[2], (0, HP - H)).reshape(1, HP).astype(jnp.float32)

    w_fc = jnp.pad(params["w_fc"],
                   ((0, HP - H), (0, OUT_LANES - 1))).astype(jnp.float32)    # (HP, 128)
    b_fc = jnp.pad(params["b_fc"],
                   (0, OUT_LANES - 1)).reshape(1, OUT_LANES).astype(jnp.float32)

    len_p = jnp.pad(lengths.astype(jnp.int32), (0, BP - B)).reshape(BP, 1)

    out = pl.pallas_call(
        gru_fused_kernel,
        out_shape=jax.ShapeDtypeStruct((BP, OUT_LANES), jnp.float32),
        grid_spec=pltpu.PrefetchScalarGridSpec(
            num_scalar_prefetch=0,
            grid=(NC,),                                    # parallel batch chunks
            in_specs=[
                pl.BlockSpec((1, T * BC, D), lambda b: (b, 0, 0)),   # x (bf16)
                pl.BlockSpec((BC, 1), lambda b: (b, 0)),             # lengths
                pl.BlockSpec((D, 3 * HP), lambda b: (0, 0)),         # w_ih
                pl.BlockSpec((HP, 3 * HP), lambda b: (0, 0)),        # w_hh
                pl.BlockSpec((1, 3 * HP), lambda b: (0, 0)),         # gbias
                pl.BlockSpec((1, HP), lambda b: (0, 0)),             # b_hh[n]
                pl.BlockSpec((HP, OUT_LANES), lambda b: (0, 0)),     # w_fc
                pl.BlockSpec((1, OUT_LANES), lambda b: (0, 0)),      # b_fc
            ],
            out_specs=pl.BlockSpec((BC, OUT_LANES), lambda b: (b, 0)),
            scratch_shapes=[pltpu.VMEM((T * BC, 3 * HP), jnp.float32)],
        ),
        compiler_params=pltpu.CompilerParams(
            dimension_semantics=("parallel",)),
    )(x, len_p, w_ih_p, w_hh_p, gbias, b_hn, w_fc, b_fc)

    # Match PyTorch: h_n is (1, B, H) -> fc1 -> sigmoid -> (1, B, 1).
    return out[:B, :1].reshape(1, B, 1)


def rnn_reference(tokens, lengths, params):
    """Pure-JAX f32 reference mirroring Embedding + packed GRU + fc1 + sigmoid."""
    emb_table = params["embedding"]
    H = params["w_hh"].shape[0]
    x = jnp.take(emb_table, tokens, axis=0).astype(jnp.float32)  # (B, T, D)
    B, T, _ = x.shape
    h0 = jnp.zeros((B, H), jnp.float32)

    def step(h, inp):
        x_t, t = inp
        gi = x_t @ params["w_ih"] + params["b_ih"]
        gh = h @ params["w_hh"] + params["b_hh"]
        i_r, i_z, i_n = gi[:, :H], gi[:, H:2 * H], gi[:, 2 * H:]
        h_r, h_z, h_n = gh[:, :H], gh[:, H:2 * H], gh[:, 2 * H:]
        r = jax.nn.sigmoid(i_r + h_r)
        z = jax.nn.sigmoid(i_z + h_z)
        n = jnp.tanh(i_n + r * h_n)
        h_new = (1.0 - z) * n + z * h
        valid = (lengths > t)[:, None]
        return jnp.where(valid, h_new, h), None

    xs = (jnp.transpose(x, (1, 0, 2)), jnp.arange(T))
    h_n, _ = jax.lax.scan(step, h0, xs)
    logit = h_n @ params["w_fc"] + params["b_fc"]
    return jax.nn.sigmoid(logit).reshape(1, B, 1)


def init_params(key, vocab_size, D, H):
    ks = jax.random.split(key, 7)
    k = 1.0 / jnp.sqrt(H)
    return {
        "embedding": jax.random.normal(ks[0], (vocab_size, D), jnp.float32),
        # PyTorch GRU weights are (3H, in); store transposed as (in, 3H).
        "w_ih": jax.random.uniform(ks[1], (D, 3 * H), jnp.float32, -k, k),
        "w_hh": jax.random.uniform(ks[2], (H, 3 * H), jnp.float32, -k, k),
        "b_ih": jax.random.uniform(ks[3], (3 * H,), jnp.float32, -k, k),
        "b_hh": jax.random.uniform(ks[4], (3 * H,), jnp.float32, -k, k),
        # fc1: Linear(D, 1) with D == H; stored as (H, 1).
        "w_fc": jax.random.uniform(ks[5], (H, 1), jnp.float32, -k, k),
        "b_fc": jax.random.uniform(ks[6], (1,), jnp.float32, -k, k),
    }


if __name__ == "__main__":
    VOCAB, D, H = 64, 32, 32   # embedding_dim == hidden_dim (required by fc1)
    B, T = 4, 8

    key = jax.random.PRNGKey(0)
    kp, kt = jax.random.split(key)
    params = init_params(kp, VOCAB, D, H)

    tokens = jax.random.randint(kt, (B, T), 0, VOCAB, dtype=jnp.int32)
    lengths = jnp.array([8, 6, 4, 2], dtype=jnp.int32)  # sorted descending

    out = rnn_forward(tokens, lengths, params)
    jax.block_until_ready(out)

    ref = rnn_reference(tokens, lengths, params)
    assert out.shape == (1, B, 1)
    # bf16 matmul inputs (f32 accumulation) vs. the pure-f32 reference:
    # relax the tolerance accordingly.
    assert jnp.allclose(out, ref, atol=2e-2, rtol=0.0), (out, ref)

    print("KERNEL_OK")
</pallas_src>

<mosaic_0001>
module attributes {stable_mosaic.version = 11 : i64} {
  func.func @gru_fused_kernel(%arg0: i32, %arg1: memref<1x64x32xbf16, #tpu.memory_space<vmem>>, %arg2: memref<8x1xi32, #tpu.memory_space<vmem>>, %arg3: memref<32x384xbf16, #tpu.memory_space<vmem>>, %arg4: memref<128x384xbf16, #tpu.memory_space<vmem>>, %arg5: memref<1x384xf32, #tpu.memory_space<vmem>>, %arg6: memref<1x128xf32, #tpu.memory_space<vmem>>, %arg7: memref<128x128xf32, #tpu.memory_space<vmem>>, %arg8: memref<1x128xf32, #tpu.memory_space<vmem>>, %arg9: memref<8x128xf32, #tpu.memory_space<vmem>>, %arg10: memref<64x384xf32, #tpu.memory_space<vmem>>) attributes {dimension_semantics = [#tpu.dimension_semantics<parallel>], iteration_bounds = array<i64: 1>, scalar_prefetch = 0 : i64, scratch_operands = 1 : i64, tpu.core_type = #tpu.core_type<tc>, window_params = [{transform_indices = @transform_0, window_bounds = array<i64: 1, 64, 32>}, {transform_indices = @transform_1, window_bounds = array<i64: 8, 1>}, {pipeline_mode = #tpu.pipeline_mode<synchronous>, transform_indices = @transform_2, window_bounds = array<i64: 32, 384>}, {pipeline_mode = #tpu.pipeline_mode<synchronous>, transform_indices = @transform_3, window_bounds = array<i64: 128, 384>}, {pipeline_mode = #tpu.pipeline_mode<synchronous>, transform_indices = @transform_4, window_bounds = array<i64: 1, 384>}, {pipeline_mode = #tpu.pipeline_mode<synchronous>, transform_indices = @transform_5, window_bounds = array<i64: 1, 128>}, {pipeline_mode = #tpu.pipeline_mode<synchronous>, transform_indices = @transform_6, window_bounds = array<i64: 128, 128>}, {pipeline_mode = #tpu.pipeline_mode<synchronous>, transform_indices = @transform_7, window_bounds = array<i64: 1, 128>}, {transform_indices = @transform_8, window_bounds = array<i64: 8, 128>}]} {
    %c0 = arith.constant 0 : index
    %c0_0 = arith.constant 0 : index
    %c0_1 = arith.constant 0 : index
    %0 = vector.load %arg1[%c0, %c0_0, %c0_1] : memref<1x64x32xbf16, #tpu.memory_space<vmem>>, vector<1x64x32xbf16>
    %1 = vector.shape_cast %0 : vector<1x64x32xbf16> to vector<64x32xbf16>
    %c0_2 = arith.constant 0 : index
    %c0_3 = arith.constant 0 : index
    %2 = vector.load %arg3[%c0_2, %c0_3] : memref<32x384xbf16, #tpu.memory_space<vmem>>, vector<32x384xbf16>
    %cst = arith.constant dense<0.000000e+00> : vector<64x384xf32>
    %3 = tpu.matmul %1, %2, %cst {dimension_numbers = #tpu.dot_dimension_numbers<[1], [0], [0], [1], [0, 0, 1, 1], [], []>} : vector<64x32xbf16>, vector<32x384xbf16>, vector<64x384xf32> -> vector<64x384xf32>
    %c0_4 = arith.constant 0 : index
    %c0_5 = arith.constant 0 : index
    %4 = vector.load %arg5[%c0_4, %c0_5] : memref<1x384xf32, #tpu.memory_space<vmem>>, vector<1x384xf32>
    %5 = vector.broadcast %4 : vector<1x384xf32> to vector<64x384xf32>
    %6 = arith.addf %3, %5 : vector<64x384xf32>
    %c0_6 = arith.constant 0 : index
    %c0_7 = arith.constant 0 : index
    %7 = vector.load %arg10[%c0_6, %c0_7] : memref<64x384xf32, #tpu.memory_space<vmem>>, vector<64x384xf32>
    tpu.vector_store %arg10[%c0_6, %c0_7], %6 {strides = array<i32>} : memref<64x384xf32, #tpu.memory_space<vmem>>, vector<64x384xf32>,
    %c0_8 = arith.constant 0 : index
    %c0_9 = arith.constant 0 : index
    %8 = vector.load %arg2[%c0_8, %c0_9] : memref<8x1xi32, #tpu.memory_space<vmem>>, vector<8x1xi32>
    %c0_10 = arith.constant 0 : index
    %c0_11 = arith.constant 0 : index
    %9 = vector.load %arg4[%c0_10, %c0_11] : memref<128x384xbf16, #tpu.memory_space<vmem>>, vector<128x384xbf16>
    %c0_12 = arith.constant 0 : index
    %c0_13 = arith.constant 0 : index
    %10 = vector.load %arg6[%c0_12, %c0_13] : memref<1x128xf32, #tpu.memory_space<vmem>>, vector<1x128xf32>
    %cst_14 = arith.constant 0.000000e+00 : f32
    %11 = vector.broadcast %cst_14 : f32 to vector<8x128xf32>
    %c0_i32 = arith.constant 0 : i32
    %c8_i32 = arith.constant 8 : i32
    %12 = arith.muli %c0_i32, %c8_i32 : i32
    %13 = tpu.assume_multiple %12, 8 : i32
    %14 = arith.index_cast %13 : i32 to index
    %c0_15 = arith.constant 0 : index
    %15 = vector.load %arg10[%14, %c0_15] : memref<64x384xf32, #tpu.memory_space<vmem>>, vector<8x384xf32>
    %16 = arith.truncf %11 : vector<8x128xf32> to vector<8x128xbf16>
    %cst_16 = arith.constant dense<0.000000e+00> : vector<8x384xf32>
    %17 = tpu.matmul %16, %9, %cst_16 {dimension_numbers = #tpu.dot_dimension_numbers<[1], [0], [0], [1], [0, 0, 1, 1], [], []>} : vector<8x128xbf16>, vector<128x384xbf16>, vector<8x384xf32> -> vector<8x384xf32>
    %18 = vector.extract_strided_slice %15 {offsets = [0, 0], sizes = [8, 128], strides = [1, 1]} : vector<8x384xf32> to vector<8x128xf32>
    %19 = vector.extract_strided_slice %17 {offsets = [0, 0], sizes = [8, 128], strides = [1, 1]} : vector<8x384xf32> to vector<8x128xf32>
    %20 = arith.addf %18, %19 : vector<8x128xf32>
    %21 = arith.negf %20 : vector<8x128xf32>
    %22 = math.exp %21 : vector<8x128xf32>
    %cst_17 = arith.constant 1.000000e+00 : f32
    %23 = vector.broadcast %cst_17 : f32 to vector<8x128xf32>
    %24 = arith.addf %23, %22 : vector<8x128xf32>
    %25 = arith.divf %23, %24 : vector<8x128xf32>
    %26 = vector.extract_strided_slice %15 {offsets = [0, 128], sizes = [8, 128], strides = [1, 1]} : vector<8x384xf32> to vector<8x128xf32>
    %27 = vector.extract_strided_slice %17 {offsets = [0, 128], sizes = [8, 128], strides = [1, 1]} : vector<8x384xf32> to vector<8x128xf32>
    %28 = arith.addf %26, %27 : vector<8x128xf32>
    %29 = arith.negf %28 : vector<8x128xf32>
    %30 = math.exp %29 : vector<8x128xf32>
    %cst_18 = arith.constant 1.000000e+00 : f32
    %31 = vector.broadcast %cst_18 : f32 to vector<8x128xf32>
    %32 = arith.addf %31, %30 : vector<8x128xf32>
    %33 = arith.divf %31, %32 : vector<8x128xf32>
    %34 = vector.extract_strided_slice %15 {offsets = [0, 256], sizes = [8, 128], strides = [1, 1]} : vector<8x384xf32> to vector<8x128xf32>
    %35 = vector.extract_strided_slice %17 {offsets = [0, 256], sizes = [8, 128], strides = [1, 1]} : vector<8x384xf32> to vector<8x128xf32>
    %36 = vector.broadcast %10 : vector<1x128xf32> to vector<8x128xf32>
    %37 = arith.addf %35, %36 : vector<8x128xf32>
    %38 = arith.mulf %25, %37 : vector<8x128xf32>
    %39 = arith.addf %34, %38 : vector<8x128xf32>
    %40 = math.tanh %39 : vector<8x128xf32>
    %cst_19 = arith.constant 1.000000e+00 : f32
    %41 = vector.broadcast %cst_19 : f32 to vector<8x128xf32>
    %42 = arith.subf %41, %33 : vector<8x128xf32>
    %43 = arith.mulf %42, %40 : vector<8x128xf32>
    %44 = arith.mulf %33, %11 : vector<8x128xf32>
    %45 = arith.addf %43, %44 : vector<8x128xf32>
    %46 = vector.broadcast %c0_i32 : i32 to vector<8x1xi32>
    %47 = arith.cmpi sgt, %8, %46 : vector<8x1xi32>
    %48 = vector.shape_cast %47 : vector<8x1xi1> to vector<8x1xi1>
    %49 = vector.broadcast %48 : vector<8x1xi1> to vector<8x128xi1>
    %50 = arith.select %49, %45, %11 : vector<8x128xi1>, vector<8x128xf32>
    %c1_i32 = arith.constant 1 : i32
    %c8_i32_20 = arith.constant 8 : i32
    %51 = arith.muli %c1_i32, %c8_i32_20 : i32
    %52 = tpu.assume_multiple %51, 8 : i32
    %53 = arith.index_cast %52 : i32 to index
    %c0_21 = arith.constant 0 : index
    %54 = vector.load %arg10[%53, %c0_21] : memref<64x384xf32, #tpu.memory_space<vmem>>, vector<8x384xf32>
    %55 = arith.truncf %50 : vector<8x128xf32> to vector<8x128xbf16>
    %cst_22 = arith.constant dense<0.000000e+00> : vector<8x384xf32>
    %56 = tpu.matmul %55, %9, %cst_22 {dimension_numbers = #tpu.dot_dimension_numbers<[1], [0], [0], [1], [0, 0, 1, 1], [], []>} : vector<8x128xbf16>, vector<128x384xbf16>, vector<8x384xf32> -> vector<8x384xf32>
    %57 = vector.extract_strided_slice %54 {offsets = [0, 0], sizes = [8, 128], strides = [1, 1]} : vector<8x384xf32> to vector<8x128xf32>
    %58 = vector.extract_strided_slice %56 {offsets = [0, 0], sizes = [8, 128], strides = [1, 1]} : vector<8x384xf32> to vector<8x128xf32>
    %59 = arith.addf %57, %58 : vector<8x128xf32>
    %60 = arith.negf %59 : vector<8x128xf32>
    %61 = math.exp %60 : vector<8x128xf32>
    %cst_23 = arith.constant 1.000000e+00 : f32
    %62 = vector.broadcast %cst_23 : f32 to vector<8x128xf32>
    %63 = arith.addf %62, %61 : vector<8x128xf32>
    %64 = arith.divf %62, %63 : vector<8x128xf32>
    %65 = vector.extract_strided_slice %54 {offsets = [0, 128], sizes = [8, 128], strides = [1, 1]} : vector<8x384xf32> to vector<8x128xf32>
    %66 = vector.extract_strided_slice %56 {offsets = [0, 128], sizes = [8, 128], strides = [1, 1]} : vector<8x384xf32> to vector<8x128xf32>
    %67 = arith.addf %65, %66 : vector<8x128xf32>
    %68 = arith.negf %67 : vector<8x128xf32>
    %69 = math.exp %68 : vector<8x128xf32>
    %cst_24 = arith.constant 1.000000e+00 : f32
    %70 = vector.broadcast %cst_24 : f32 to vector<8x128xf32>
    %71 = arith.addf %70, %69 : vector<8x128xf32>
    %72 = arith.divf %70, %71 : vector<8x128xf32>
    %73 = vector.extract_strided_slice %54 {offsets = [0, 256], sizes = [8, 128], strides = [1, 1]} : vector<8x384xf32> to vector<8x128xf32>
    %74 = vector.extract_strided_slice %56 {offsets = [0, 256], sizes = [8, 128], strides = [1, 1]} : vector<8x384xf32> to vector<8x128xf32>
    %75 = vector.broadcast %10 : vector<1x128xf32> to vector<8x128xf32>
    %76 = arith.addf %74, %75 : vector<8x128xf32>
    %77 = arith.mulf %64, %76 : vector<8x128xf32>
    %78 = arith.addf %73, %77 : vector<8x128xf32>
    %79 = math.tanh %78 : vector<8x128xf32>
    %cst_25 = arith.constant 1.000000e+00 : f32
    %80 = vector.broadcast %cst_25 : f32 to vector<8x128xf32>
    %81 = arith.subf %80, %72 : vector<8x128xf32>
    %82 = arith.mulf %81, %79 : vector<8x128xf32>
    %83 = arith.mulf %72, %50 : vector<8x128xf32>
    %84 = arith.addf %82, %83 : vector<8x128xf32>
    %85 = vector.broadcast %c1_i32 : i32 to vector<8x1xi32>
    %86 = arith.cmpi sgt, %8, %85 : vector<8x1xi32>
    %87 = vector.shape_cast %86 : vector<8x1xi1> to vector<8x1xi1>
    %88 = vector.broadcast %87 : vector<8x1xi1> to vector<8x128xi1>
    %89 = arith.select %88, %84, %50 : vector<8x128xi1>, vector<8x128xf32>
    %c2_i32 = arith.constant 2 : i32
    %c8_i32_26 = arith.constant 8 : i32
    %90 = arith.muli %c2_i32, %c8_i32_26 : i32
    %91 = tpu.assume_multiple %90, 8 : i32
    %92 = arith.index_cast %91 : i32 to index
    %c0_27 = arith.constant 0 : index
    %93 = vector.load %arg10[%92, %c0_27] : memref<64x384xf32, #tpu.memory_space<vmem>>, vector<8x384xf32>
    %94 = arith.truncf %89 : vector<8x128xf32> to vector<8x128xbf16>
    %cst_28 = arith.constant dense<0.000000e+00> : vector<8x384xf32>
    %95 = tpu.matmul %94, %9, %cst_28 {dimension_numbers = #tpu.dot_dimension_numbers<[1], [0], [0], [1], [0, 0, 1, 1], [], []>} : vector<8x128xbf16>, vector<128x384xbf16>, vector<8x384xf32> -> vector<8x384xf32>
    %96 = vector.extract_strided_slice %93 {offsets = [0, 0], sizes = [8, 128], strides = [1, 1]} : vector<8x384xf32> to vector<8x128xf32>
    %97 = vector.extract_strided_slice %95 {offsets = [0, 0], sizes = [8, 128], strides = [1, 1]} : vector<8x384xf32> to vector<8x128xf32>
    %98 = arith.addf %96, %97 : vector<8x128xf32>
    %99 = arith.negf %98 : vector<8x128xf32>
    %100 = math.exp %99 : vector<8x128xf32>
    %cst_29 = arith.constant 1.000000e+00 : f32
    %101 = vector.broadcast %cst_29 : f32 to vector<8x128xf32>
    %102 = arith.addf %101, %100 : vector<8x128xf32>
    %103 = arith.divf %101, %102 : vector<8x128xf32>
    %104 = vector.extract_strided_slice %93 {offsets = [0, 128], sizes = [8, 128], strides = [1, 1]} : vector<8x384xf32> to vector<8x128xf32>
    %105 = vector.extract_strided_slice %95 {offsets = [0, 128], sizes = [8, 128], strides = [1, 1]} : vector<8x384xf32> to vector<8x128xf32>
    %106 = arith.addf %104, %105 : vector<8x128xf32>
    %107 = arith.negf %106 : vector<8x128xf32>
    %108 = math.exp %107 : vector<8x128xf32>
    %cst_30 = arith.constant 1.000000e+00 : f32
    %109 = vector.broadcast %cst_30 : f32 to vector<8x128xf32>
    %110 = arith.addf %109, %108 : vector<8x128xf32>
    %111 = arith.divf %109, %110 : vector<8x128xf32>
    %112 = vector.extract_strided_slice %93 {offsets = [0, 256], sizes = [8, 128], strides = [1, 1]} : vector<8x384xf32> to vector<8x128xf32>
    %113 = vector.extract_strided_slice %95 {offsets = [0, 256], sizes = [8, 128], strides = [1, 1]} : vector<8x384xf32> to vector<8x128xf32>
    %114 = vector.broadcast %10 : vector<1x128xf32> to vector<8x128xf32>
    %115 = arith.addf %113, %114 : vector<8x128xf32>
    %116 = arith.mulf %103, %115 : vector<8x128xf32>
    %117 = arith.addf %112, %116 : vector<8x128xf32>
    %118 = math.tanh %117 : vector<8x128xf32>
    %cst_31 = arith.constant 1.000000e+00 : f32
    %119 = vector.broadcast %cst_31 : f32 to vector<8x128xf32>
    %120 = arith.subf %119, %111 : vector<8x128xf32>
    %121 = arith.mulf %120, %118 : vector<8x128xf32>
    %122 = arith.mulf %111, %89 : vector<8x128xf32>
    %123 = arith.addf %121, %122 : vector<8x128xf32>
    %124 = vector.broadcast %c2_i32 : i32 to vector<8x1xi32>
    %125 = arith.cmpi sgt, %8, %124 : vector<8x1xi32>
    %126 = vector.shape_cast %125 : vector<8x1xi1> to vector<8x1xi1>
    %127 = vector.broadcast %126 : vector<8x1xi1> to vector<8x128xi1>
    %128 = arith.select %127, %123, %89 : vector<8x128xi1>, vector<8x128xf32>
    %c3_i32 = arith.constant 3 : i32
    %c8_i32_32 = arith.constant 8 : i32
    %129 = arith.muli %c3_i32, %c8_i32_32 : i32
    %130 = tpu.assume_multiple %129, 8 : i32
    %131 = arith.index_cast %130 : i32 to index
    %c0_33 = arith.constant 0 : index
    %132 = vector.load %arg10[%131, %c0_33] : memref<64x384xf32, #tpu.memory_space<vmem>>, vector<8x384xf32>
    %133 = arith.truncf %128 : vector<8x128xf32> to vector<8x128xbf16>
    %cst_34 = arith.constant dense<0.000000e+00> : vector<8x384xf32>
    %134 = tpu.matmul %133, %9, %cst_34 {dimension_numbers = #tpu.dot_dimension_numbers<[1], [0], [0], [1], [0, 0, 1, 1], [], []>} : vector<8x128xbf16>, vector<128x384xbf16>, vector<8x384xf32> -> vector<8x384xf32>
    %135 = vector.extract_strided_slice %132 {offsets = [0, 0], sizes = [8, 128], strides = [1, 1]} : vector<8x384xf32> to vector<8x128xf32>
    %136 = vector.extract_strided_slice %134 {offsets = [0, 0], sizes = [8, 128], strides = [1, 1]} : vector<8x384xf32> to vector<8x128xf32>
    %137 = arith.addf %135, %136 : vector<8x128xf32>
    %138 = arith.negf %137 : vector<8x128xf32>
    %139 = math.exp %138 : vector<8x128xf32>
    %cst_35 = arith.constant 1.000000e+00 : f32
    %140 = vector.broadcast %cst_35 : f32 to vector<8x128xf32>
    %141 = arith.addf %140, %139 : vector<8x128xf32>
    %142 = arith.divf %140, %141 : vector<8x128xf32>
    %143 = vector.extract_strided_slice %132 {offsets = [0, 128], sizes = [8, 128], strides = [1, 1]} : vector<8x384xf32> to vector<8x128xf32>
    %144 = vector.extract_strided_slice %134 {offsets = [0, 128], sizes = [8, 128], strides = [1, 1]} : vector<8x384xf32> to vector<8x128xf32>
    %145 = arith.addf %143, %144 : vector<8x128xf32>
    %146 = arith.negf %145 : vector<8x128xf32>
    %147 = math.exp %146 : vector<8x128xf32>
    %cst_36 = arith.constant 1.000000e+00 : f32
    %148 = vector.broadcast %cst_36 : f32 to vector<8x128xf32>
    %149 = arith.addf %148, %147 : vector<8x128xf32>
    %150 = arith.divf %148, %149 : vector<8x128xf32>
    %151 = vector.extract_strided_slice %132 {offsets = [0, 256], sizes = [8, 128], strides = [1, 1]} : vector<8x384xf32> to vector<8x128xf32>
    %152 = vector.extract_strided_slice %134 {offsets = [0, 256], sizes = [8, 128], strides = [1, 1]} : vector<8x384xf32> to vector<8x128xf32>
    %153 = vector.broadcast %10 : vector<1x128xf32> to vector<8x128xf32>
    %154 = arith.addf %152, %153 : vector<8x128xf32>
    %155 = arith.mulf %142, %154 : vector<8x128xf32>
    %156 = arith.addf %151, %155 : vector<8x128xf32>
    %157 = math.tanh %156 : vector<8x128xf32>
    %cst_37 = arith.constant 1.000000e+00 : f32
    %158 = vector.broadcast %cst_37 : f32 to vector<8x128xf32>
    %159 = arith.subf %158, %150 : vector<8x128xf32>
    %160 = arith.mulf %159, %157 : vector<8x128xf32>
    %161 = arith.mulf %150, %128 : vector<8x128xf32>
    %162 = arith.addf %160, %161 : vector<8x128xf32>
    %163 = vector.broadcast %c3_i32 : i32 to vector<8x1xi32>
    %164 = arith.cmpi sgt, %8, %163 : vector<8x1xi32>
    %165 = vector.shape_cast %164 : vector<8x1xi1> to vector<8x1xi1>
    %166 = vector.broadcast %165 : vector<8x1xi1> to vector<8x128xi1>
    %167 = arith.select %166, %162, %128 : vector<8x128xi1>, vector<8x128xf32>
    %c4_i32 = arith.constant 4 : i32
    %c8_i32_38 = arith.constant 8 : i32
    %168 = arith.muli %c4_i32, %c8_i32_38 : i32
    %169 = tpu.assume_multiple %168, 8 : i32
    %170 = arith.index_cast %169 : i32 to index
    %c0_39 = arith.constant 0 : index
    %171 = vector.load %arg10[%170, %c0_39] : memref<64x384xf32, #tpu.memory_space<vmem>>, vector<8x384xf32>
    %172 = arith.truncf %167 : vector<8x128xf32> to vector<8x128xbf16>
    %cst_40 = arith.constant dense<0.000000e+00> : vector<8x384xf32>
    %173 = tpu.matmul %172, %9, %cst_40 {dimension_numbers = #tpu.dot_dimension_numbers<[1], [0], [0], [1], [0, 0, 1, 1], [], []>} : vector<8x128xbf16>, vector<128x384xbf16>, vector<8x384xf32> -> vector<8x384xf32>
    %174 = vector.extract_strided_slice %171 {offsets = [0, 0], sizes = [8, 128], strides = [1, 1]} : vector<8x384xf32> to vector<8x128xf32>
    %175 = vector.extract_strided_slice %173 {offsets = [0, 0], sizes = [8, 128], strides = [1, 1]} : vector<8x384xf32> to vector<8x128xf32>
    %176 = arith.addf %174, %175 : vector<8x128xf32>
    %177 = arith.negf %176 : vector<8x128xf32>
    %178 = math.exp %177 : vector<8x128xf32>
    %cst_41 = arith.constant 1.000000e+00 : f32
    %179 = vector.broadcast %cst_41 : f32 to vector<8x128xf32>
    %180 = arith.addf %179, %178 : vector<8x128xf32>
    %181 = arith.divf %179, %180 : vector<8x128xf32>
    %182 = vector.extract_strided_slice %171 {offsets = [0, 128], sizes = [8, 128], strides = [1, 1]} : vector<8x384xf32> to vector<8x128xf32>
    %183 = vector.extract_strided_slice %173 {offsets = [0, 128], sizes = [8, 128], strides = [1, 1]} : vector<8x384xf32> to vector<8x128xf32>
    %184 = arith.addf %182, %183 : vector<8x128xf32>
    %185 = arith.negf %184 : vector<8x128xf32>
    %186 = math.exp %185 : vector<8x128xf32>
    %cst_42 = arith.constant 1.000000e+00 : f32
    %187 = vector.broadcast %cst_42 : f32 to vector<8x128xf32>
    %188 = arith.addf %187, %186 : vector<8x128xf32>
    %189 = arith.divf %187, %188 : vector<8x128xf32>
    %190 = vector.extract_strided_slice %171 {offsets = [0, 256], sizes = [8, 128], strides = [1, 1]} : vector<8x384xf32> to vector<8x128xf32>
    %191 = vector.extract_strided_slice %173 {offsets = [0, 256], sizes = [8, 128], strides = [1, 1]} : vector<8x384xf32> to vector<8x128xf32>
    %192 = vector.broadcast %10 : vector<1x128xf32> to vector<8x128xf32>
    %193 = arith.addf %191, %192 : vector<8x128xf32>
    %194 = arith.mulf %181, %193 : vector<8x128xf32>
    %195 = arith.addf %190, %194 : vector<8x128xf32>
    %196 = math.tanh %195 : vector<8x128xf32>
    %cst_43 = arith.constant 1.000000e+00 : f32
    %197 = vector.broadcast %cst_43 : f32 to vector<8x128xf32>
    %198 = arith.subf %197, %189 : vector<8x128xf32>
    %199 = arith.mulf %198, %196 : vector<8x128xf32>
    %200 = arith.mulf %189, %167 : vector<8x128xf32>
    %201 = arith.addf %199, %200 : vector<8x128xf32>
    %202 = vector.broadcast %c4_i32 : i32 to vector<8x1xi32>
    %203 = arith.cmpi sgt, %8, %202 : vector<8x1xi32>
    %204 = vector.shape_cast %203 : vector<8x1xi1> to vector<8x1xi1>
    %205 = vector.broadcast %204 : vector<8x1xi1> to vector<8x128xi1>
    %206 = arith.select %205, %201, %167 : vector<8x128xi1>, vector<8x128xf32>
    %c5_i32 = arith.constant 5 : i32
    %c8_i32_44 = arith.constant 8 : i32
    %207 = arith.muli %c5_i32, %c8_i32_44 : i32
    %208 = tpu.assume_multiple %207, 8 : i32
    %209 = arith.index_cast %208 : i32 to index
    %c0_45 = arith.constant 0 : index
    %210 = vector.load %arg10[%209, %c0_45] : memref<64x384xf32, #tpu.memory_space<vmem>>, vector<8x384xf32>
    %211 = arith.truncf %206 : vector<8x128xf32> to vector<8x128xbf16>
    %cst_46 = arith.constant dense<0.000000e+00> : vector<8x384xf32>
    %212 = tpu.matmul %211, %9, %cst_46 {dimension_numbers = #tpu.dot_dimension_numbers<[1], [0], [0], [1], [0, 0, 1, 1], [], []>} : vector<8x128xbf16>, vector<128x384xbf16>, vector<8x384xf32> -> vector<8x384xf32>
    %213 = vector.extract_strided_slice %210 {offsets = [0, 0], sizes = [8, 128], strides = [1, 1]} : vector<8x384xf32> to vector<8x128xf32>
    %214 = vector.extract_strided_slice %212 {offsets = [0, 0], sizes = [8, 128], strides = [1, 1]} : vector<8x384xf32> to vector<8x128xf32>
    %215 = arith.addf %213, %214 : vector<8x128xf32>
    %216 = arith.negf %215 : vector<8x128xf32>
    %217 = math.exp %216 : vector<8x128xf32>
    %cst_47 = arith.constant 1.000000e+00 : f32
    %218 = vector.broadcast %cst_47 : f32 to vector<8x128xf32>
    %219 = arith.addf %218, %217 : vector<8x128xf32>
    %220 = arith.divf %218, %219 : vector<8x128xf32>
    %221 = vector.extract_strided_slice %210 {offsets = [0, 128], sizes = [8, 128], strides = [1, 1]} : vector<8x384xf32> to vector<8x128xf32>
    %222 = vector.extract_strided_slice %212 {offsets = [0, 128], sizes = [8, 128], strides = [1, 1]} : vector<8x384xf32> to vector<8x128xf32>
    %223 = arith.addf %221, %222 : vector<8x128xf32>
    %224 = arith.negf %223 : vector<8x128xf32>
    %225 = math.exp %224 : vector<8x128xf32>
    %cst_48 = arith.constant 1.000000e+00 : f32
    %226 = vector.broadcast %cst_48 : f32 to vector<8x128xf32>
    %227 = arith.addf %226, %225 : vector<8x128xf32>
    %228 = arith.divf %226, %227 : vector<8x128xf32>
    %229 = vector.extract_strided_slice %210 {offsets = [0, 256], sizes = [8, 128], strides = [1, 1]} : vector<8x384xf32> to vector<8x128xf32>
    %230 = vector.extract_strided_slice %212 {offsets = [0, 256], sizes = [8, 128], strides = [1, 1]} : vector<8x384xf32> to vector<8x128xf32>
    %231 = vector.broadcast %10 : vector<1x128xf32> to vector<8x128xf32>
    %232 = arith.addf %230, %231 : vector<8x128xf32>
    %233 = arith.mulf %220, %232 : vector<8x128xf32>
    %234 = arith.addf %229, %233 : vector<8x128xf32>
    %235 = math.tanh %234 : vector<8x128xf32>
    %cst_49 = arith.constant 1.000000e+00 : f32
    %236 = vector.broadcast %cst_49 : f32 to vector<8x128xf32>
    %237 = arith.subf %236, %228 : vector<8x128xf32>
    %238 = arith.mulf %237, %235 : vector<8x128xf32>
    %239 = arith.mulf %228, %206 : vector<8x128xf32>
    %240 = arith.addf %238, %239 : vector<8x128xf32>
    %241 = vector.broadcast %c5_i32 : i32 to vector<8x1xi32>
    %242 = arith.cmpi sgt, %8, %241 : vector<8x1xi32>
    %243 = vector.shape_cast %242 : vector<8x1xi1> to vector<8x1xi1>
    %244 = vector.broadcast %243 : vector<8x1xi1> to vector<8x128xi1>
    %245 = arith.select %244, %240, %206 : vector<8x128xi1>, vector<8x128xf32>
    %c6_i32 = arith.constant 6 : i32
    %c8_i32_50 = arith.constant 8 : i32
    %246 = arith.muli %c6_i32, %c8_i32_50 : i32
    %247 = tpu.assume_multiple %246, 8 : i32
    %248 = arith.index_cast %247 : i32 to index
    %c0_51 = arith.constant 0 : index
    %249 = vector.load %arg10[%248, %c0_51] : memref<64x384xf32, #tpu.memory_space<vmem>>, vector<8x384xf32>
    %250 = arith.truncf %245 : vector<8x128xf32> to vector<8x128xbf16>
    %cst_52 = arith.constant dense<0.000000e+00> : vector<8x384xf32>
    %251 = tpu.matmul %250, %9, %cst_52 {dimension_numbers = #tpu.dot_dimension_numbers<[1], [0], [0], [1], [0, 0, 1, 1], [], []>} : vector<8x128xbf16>, vector<128x384xbf16>, vector<8x384xf32> -> vector<8x384xf32>
    %252 = vector.extract_strided_slice %249 {offsets = [0, 0], sizes = [8, 128], strides = [1, 1]} : vector<8x384xf32> to vector<8x128xf32>
    %253 = vector.extract_strided_slice %251 {offsets = [0, 0], sizes = [8, 128], strides = [1, 1]} : vector<8x384xf32> to vector<8x128xf32>
    %254 = arith.addf %252, %253 : vector<8x128xf32>
    %255 = arith.negf %254 : vector<8x128xf32>
    %256 = math.exp %255 : vector<8x128xf32>
    %cst_53 = arith.constant 1.000000e+00 : f32
    %257 = vector.broadcast %cst_53 : f32 to vector<8x128xf32>
    %258 = arith.addf %257, %256 : vector<8x128xf32>
    %259 = arith.divf %257, %258 : vector<8x128xf32>
    %260 = vector.extract_strided_slice %249 {offsets = [0, 128], sizes = [8, 128], strides = [1, 1]} : vector<8x384xf32> to vector<8x128xf32>
    %261 = vector.extract_strided_slice %251 {offsets = [0, 128], sizes = [8, 128], strides = [1, 1]} : vector<8x384xf32> to vector<8x128xf32>
    %262 = arith.addf %260, %261 : vector<8x128xf32>
    %263 = arith.negf %262 : vector<8x128xf32>
    %264 = math.exp %263 : vector<8x128xf32>
    %cst_54 = arith.constant 1.000000e+00 : f32
    %265 = vector.broadcast %cst_54 : f32 to vector<8x128xf32>
    %266 = arith.addf %265, %264 : vector<8x128xf32>
    %267 = arith.divf %265, %266 : vector<8x128xf32>
    %268 = vector.extract_strided_slice %249 {offsets = [0, 256], sizes = [8, 128], strides = [1, 1]} : vector<8x384xf32> to vector<8x128xf32>
    %269 = vector.extract_strided_slice %251 {offsets = [0, 256], sizes = [8, 128], strides = [1, 1]} : vector<8x384xf32> to vector<8x128xf32>
    %270 = vector.broadcast %10 : vector<1x128xf32> to vector<8x128xf32>
    %271 = arith.addf %269, %270 : vector<8x128xf32>
    %272 = arith.mulf %259, %271 : vector<8x128xf32>
    %273 = arith.addf %268, %272 : vector<8x128xf32>
    %274 = math.tanh %273 : vector<8x128xf32>
    %cst_55 = arith.constant 1.000000e+00 : f32
    %275 = vector.broadcast %cst_55 : f32 to vector<8x128xf32>
    %276 = arith.subf %275, %267 : vector<8x128xf32>
    %277 = arith.mulf %276, %274 : vector<8x128xf32>
    %278 = arith.mulf %267, %245 : vector<8x128xf32>
    %279 = arith.addf %277, %278 : vector<8x128xf32>
    %280 = vector.broadcast %c6_i32 : i32 to vector<8x1xi32>
    %281 = arith.cmpi sgt, %8, %280 : vector<8x1xi32>
    %282 = vector.shape_cast %281 : vector<8x1xi1> to vector<8x1xi1>
    %283 = vector.broadcast %282 : vector<8x1xi1> to vector<8x128xi1>
    %284 = arith.select %283, %279, %245 : vector<8x128xi1>, vector<8x128xf32>
    %c7_i32 = arith.constant 7 : i32
    %c8_i32_56 = arith.constant 8 : i32
    %285 = arith.muli %c7_i32, %c8_i32_56 : i32
    %286 = tpu.assume_multiple %285, 8 : i32
    %287 = arith.index_cast %286 : i32 to index
    %c0_57 = arith.constant 0 : index
    %288 = vector.load %arg10[%287, %c0_57] : memref<64x384xf32, #tpu.memory_space<vmem>>, vector<8x384xf32>
    %289 = arith.truncf %284 : vector<8x128xf32> to vector<8x128xbf16>
    %cst_58 = arith.constant dense<0.000000e+00> : vector<8x384xf32>
    %290 = tpu.matmul %289, %9, %cst_58 {dimension_numbers = #tpu.dot_dimension_numbers<[1], [0], [0], [1], [0, 0, 1, 1], [], []>} : vector<8x128xbf16>, vector<128x384xbf16>, vector<8x384xf32> -> vector<8x384xf32>
    %291 = vector.extract_strided_slice %288 {offsets = [0, 0], sizes = [8, 128], strides = [1, 1]} : vector<8x384xf32> to vector<8x128xf32>
    %292 = vector.extract_strided_slice %290 {offsets = [0, 0], sizes = [8, 128], strides = [1, 1]} : vector<8x384xf32> to vector<8x128xf32>
    %293 = arith.addf %291, %292 : vector<8x128xf32>
    %294 = arith.negf %293 : vector<8x128xf32>
    %295 = math.exp %294 : vector<8x128xf32>
    %cst_59 = arith.constant 1.000000e+00 : f32
    %296 = vector.broadcast %cst_59 : f32 to vector<8x128xf32>
    %297 = arith.addf %296, %295 : vector<8x128xf32>
    %298 = arith.divf %296, %297 : vector<8x128xf32>
    %299 = vector.extract_strided_slice %288 {offsets = [0, 128], sizes = [8, 128], strides = [1, 1]} : vector<8x384xf32> to vector<8x128xf32>
    %300 = vector.extract_strided_slice %290 {offsets = [0, 128], sizes = [8, 128], strides = [1, 1]} : vector<8x384xf32> to vector<8x128xf32>
    %301 = arith.addf %299, %300 : vector<8x128xf32>
    %302 = arith.negf %301 : vector<8x128xf32>
    %303 = math.exp %302 : vector<8x128xf32>
    %cst_60 = arith.constant 1.000000e+00 : f32
    %304 = vector.broadcast %cst_60 : f32 to vector<8x128xf32>
    %305 = arith.addf %304, %303 : vector<8x128xf32>
    %306 = arith.divf %304, %305 : vector<8x128xf32>
    %307 = vector.extract_strided_slice %288 {offsets = [0, 256], sizes = [8, 128], strides = [1, 1]} : vector<8x384xf32> to vector<8x128xf32>
    %308 = vector.extract_strided_slice %290 {offsets = [0, 256], sizes = [8, 128], strides = [1, 1]} : vector<8x384xf32> to vector<8x128xf32>
    %309 = vector.broadcast %10 : vector<1x128xf32> to vector<8x128xf32>
    %310 = arith.addf %308, %309 : vector<8x128xf32>
    %311 = arith.mulf %298, %310 : vector<8x128xf32>
    %312 = arith.addf %307, %311 : vector<8x128xf32>
    %313 = math.tanh %312 : vector<8x128xf32>
    %cst_61 = arith.constant 1.000000e+00 : f32
    %314 = vector.broadcast %cst_61 : f32 to vector<8x128xf32>
    %315 = arith.subf %314, %306 : vector<8x128xf32>
    %316 = arith.mulf %315, %313 : vector<8x128xf32>
    %317 = arith.mulf %306, %284 : vector<8x128xf32>
    %318 = arith.addf %316, %317 : vector<8x128xf32>
    %319 = vector.broadcast %c7_i32 : i32 to vector<8x1xi32>
    %320 = arith.cmpi sgt, %8, %319 : vector<8x1xi32>
    %321 = vector.shape_cast %320 : vector<8x1xi1> to vector<8x1xi1>
    %322 = vector.broadcast %321 : vector<8x1xi1> to vector<8x128xi1>
    %323 = arith.select %322, %318, %284 : vector<8x128xi1>, vector<8x128xf32>
    %c8_i32_62 = arith.constant 8 : i32
    %c0_63 = arith.constant 0 : index
    %c0_64 = arith.constant 0 : index
    %324 = vector.load %arg7[%c0_63, %c0_64] : memref<128x128xf32, #tpu.memory_space<vmem>>, vector<128x128xf32>
    %cst_65 = arith.constant dense<0.000000e+00> : vector<8x128xf32>
    %325 = tpu.matmul %323, %324, %cst_65 {dimension_numbers = #tpu.dot_dimension_numbers<[1], [0], [0], [1], [0, 0, 1, 1], [], []>} : vector<8x128xf32>, vector<128x128xf32>, vector<8x128xf32> -> vector<8x128xf32>
    %c0_66 = arith.constant 0 : index
    %c0_67 = arith.constant 0 : index
    %326 = vector.load %arg8[%c0_66, %c0_67] : memref<1x128xf32, #tpu.memory_space<vmem>>, vector<1x128xf32>
    %327 = vector.broadcast %326 : vector<1x128xf32> to vector<8x128xf32>
    %328 = arith.addf %325, %327 : vector<8x128xf32>
    %329 = arith.negf %328 : vector<8x128xf32>
    %330 = math.exp %329 : vector<8x128xf32>
    %cst_68 = arith.constant 1.000000e+00 : f32
    %331 = vector.broadcast %cst_68 : f32 to vector<8x128xf32>
    %332 = arith.addf %331, %330 : vector<8x128xf32>
    %333 = arith.divf %331, %332 : vector<8x128xf32>
    %c0_69 = arith.constant 0 : index
    %c0_70 = arith.constant 0 : index
    %334 = vector.load %arg9[%c0_69, %c0_70] : memref<8x128xf32, #tpu.memory_space<vmem>>, vector<8x128xf32>
    tpu.vector_store %arg9[%c0_69, %c0_70], %333 {strides = array<i32>} : memref<8x128xf32, #tpu.memory_space<vmem>>, vector<8x128xf32>,
    return
  }
  func.func @transform_0(%arg0: i32) -> (i32, i32, i32) {
    %c0_i32 = arith.constant 0 : i32
    %c0_i32_0 = arith.constant 0 : i32
    %c0_i32_1 = arith.constant 0 : i32
    return %arg0, %c0_i32, %c0_i32_0 : i32, i32, i32
  }
  func.func @transform_1(%arg0: i32) -> (i32, i32) {
    %c0_i32 = arith.constant 0 : i32
    %c0_i32_0 = arith.constant 0 : i32
    return %arg0, %c0_i32 : i32, i32
  }
  func.func @transform_2(%arg0: i32) -> (i32, i32) {
    %c0_i32 = arith.constant 0 : i32
    %c0_i32_0 = arith.constant 0 : i32
    %c0_i32_1 = arith.constant 0 : i32
    return %c0_i32, %c0_i32_0 : i32, i32
  }
  func.func @transform_3(%arg0: i32) -> (i32, i32) {
    %c0_i32 = arith.constant 0 : i32
    %c0_i32_0 = arith.constant 0 : i32
    %c0_i32_1 = arith.constant 0 : i32
    return %c0_i32, %c0_i32_0 : i32, i32
  }
  func.func @transform_4(%arg0: i32) -> (i32, i32) {
    %c0_i32 = arith.constant 0 : i32
    %c0_i32_0 = arith.constant 0 : i32
    %c0_i32_1 = arith.constant 0 : i32
    return %c0_i32, %c0_i32_0 : i32, i32
  }
  func.func @transform_5(%arg0: i32) -> (i32, i32) {
    %c0_i32 = arith.constant 0 : i32
    %c0_i32_0 = arith.constant 0 : i32
    %c0_i32_1 = arith.constant 0 : i32
    return %c0_i32, %c0_i32_0 : i32, i32
  }
  func.func @transform_6(%arg0: i32) -> (i32, i32) {
    %c0_i32 = arith.constant 0 : i32
    %c0_i32_0 = arith.constant 0 : i32
    %c0_i32_1 = arith.constant 0 : i32
    return %c0_i32, %c0_i32_0 : i32, i32
  }
  func.func @transform_7(%arg0: i32) -> (i32, i32) {
    %c0_i32 = arith.constant 0 : i32
    %c0_i32_0 = arith.constant 0 : i32
    %c0_i32_1 = arith.constant 0 : i32
    return %c0_i32, %c0_i32_0 : i32, i32
  }
  func.func @transform_8(%arg0: i32) -> (i32, i32) {
    %c0_i32 = arith.constant 0 : i32
    %c0_i32_0 = arith.constant 0 : i32
    return %arg0, %c0_i32 : i32, i32
  }
}

</mosaic_0001>

<llo_original>
// kernel: tpu_custom_call.1
$region0: #{tpu_custom_call.1}
  #allocation0 [shape = 'u32[]', space=smem, size = 0x4, offset = 0x4, fixed_abs, tag = 'smem constant byte address 0x4 - core index']
  #allocation1 [shape = 'u32[144,128]{1,0:T(1,128)}', space=vmem, size = 0x12000, scoped, tag = 'internal scratch']
  #allocation2 [shape = 'f32[64,384]{1,0:T(8,128)}', space=vmem, size = 0x18000, scoped, tag = 'scratch operand']
  %s0 = inlined_call_operand.vmem [shape: bf16[1,64,32], index: 0, kind: input, shape index: {}]
  %s1 = inlined_call_operand.vmem [shape: s32[8,1], index: 1, kind: input, shape index: {}]
  %s2 = inlined_call_operand.vmem [shape: bf16[32,384], index: 2, kind: input, shape index: {}]
  %s3 = inlined_call_operand.hbm [shape: bf16[128,384], index: 3, kind: input, shape index: {}]
  %s4 = inlined_call_operand.vmem [shape: f32[1,384], index: 4, kind: input, shape index: {}]
  %s5 = inlined_call_operand.vmem [shape: f32[1,128], index: 5, kind: input, shape index: {}]
  %s6 = inlined_call_operand.hbm [shape: f32[128,128], index: 6, kind: input, shape index: {}]
  %s7 = inlined_call_operand.vmem [shape: f32[1,128], index: 7, kind: input, shape index: {}]
  %s8 = inlined_call_operand.hbm [shape: f32[8,128], index: 8, kind: output, shape index: {}]
  %s9 = sld [smem:[#allocation0]]
  $region50: #{tpu_custom_call.1} parent=0
    _
  %s11 = ssub.s32 1, %s9
  %s12 = scalar_select 0, %s11, %s9
  $region1: #{tpu_custom_call.1} parent=0
    #allocation3 [shape = 'u8[98304]{0}', space=vmem, size = 0x18000, scoped, tag = 'input window, operand 3, single buffered']
    #allocation4 [shape = 's32[1]{0}', space=sflag, size = 0x4, scoped, tag = 'scoped memory for tpu_custom_call.1']
    #allocation5 [shape = 's32[1]{0}', space=sflag, size = 0x4, scoped, tag = 'scoped memory for tpu_custom_call.1']
    #allocation6 [shape = 'u8[65536]{0}', space=vmem, size = 0x10000, scoped, tag = 'input window, operand 6, single buffered']
    #allocation7 [shape = 's32[1]{0}', space=sflag, size = 0x4, scoped, tag = 'scoped memory for tpu_custom_call.1']
    #allocation8 [shape = 'u8[4096]{0}', space=vmem, size = 0x1000, scoped, tag = 'output window, operand 0, single buffered']
    %13 = vsyncpa [#allocation4], 0
    %14 = vsyncpa [#allocation7], 0
    %15 = vsyncpa [#allocation5], 0
    // Predicated region
    $region2: #{tpu_custom_call.1} parent=1 // pred_check
      _
    $region3: #{tpu_custom_call.1} parent=1 // pred_check_branch
      %17 = sbr.rel (0) target = $region5
    $region4: #{tpu_custom_call.1} parent=1 // pred_region
      _
    $region5: #{tpu_custom_call.1} parent=1 // pred_fallthru
      _
    // Predicated region
    $region6: #{tpu_custom_call.1} parent=1 // pred_check
      _
    $region7: #{tpu_custom_call.1} parent=1 // pred_check_branch
      %19 = sbr.rel (0) target = $region9
    $region8: #{tpu_custom_call.1} parent=1 // pred_region
      _
    $region9: #{tpu_custom_call.1} parent=1 // pred_fallthru
      _
    // Predicated region
    $region10: #{tpu_custom_call.1} parent=1 // pred_check
      _
    $region11: #{tpu_custom_call.1} parent=1 // pred_check_branch
      %21 = sbr.rel (0) target = $region13
    $region12: #{tpu_custom_call.1} parent=1 // pred_region
      _
    $region13: #{tpu_custom_call.1} parent=1 // pred_fallthru
      _
    // Predicated region
    $region14: #{tpu_custom_call.1} parent=1 // pred_check
      _
    $region15: #{tpu_custom_call.1} parent=1 // pred_check_branch
      %23 = sbr.rel (0) target = $region17
    $region16: #{tpu_custom_call.1} parent=1 // pred_region
      %s25 = ssub.s32 3072, 3072
      %26 = vsyncadd [#allocation4], %s25
      %s27 = sshll.u32 [#allocation3], 4
      %s28 = int_to_ptr.vmem [resolvable:$true] %s27
      %33 = dma.hbm_to_vmem [thread:$0]  %s3, 3072, %s28, [#allocation4], 192, 192, 12
    $region17: #{tpu_custom_call.1} parent=1 // pred_fallthru
      _
    // Predicated region
    $region18: #{tpu_custom_call.1} parent=1 // pred_check
      _
    $region19: #{tpu_custom_call.1} parent=1 // pred_check_branch
      %35 = sbr.rel (0) target = $region21
    $region20: #{tpu_custom_call.1} parent=1 // pred_region
      _
    $region21: #{tpu_custom_call.1} parent=1 // pred_fallthru
      _
    // Predicated region
    $region22: #{tpu_custom_call.1} parent=1 // pred_check
      _
    $region23: #{tpu_custom_call.1} parent=1 // pred_check_branch
      %37 = sbr.rel (0) target = $region25
    $region24: #{tpu_custom_call.1} parent=1 // pred_region
      _
    $region25: #{tpu_custom_call.1} parent=1 // pred_fallthru
      _
    // Predicated region
    $region26: #{tpu_custom_call.1} parent=1 // pred_check
      _
    $region27: #{tpu_custom_call.1} parent=1 // pred_check_branch
      %39 = sbr.rel (0) target = $region29
    $region28: #{tpu_custom_call.1} parent=1 // pred_region
      %s41 = ssub.s32 2048, 2048
      %42 = vsyncadd [#allocation7], %s41
      %s43 = sshll.u32 [#allocation6], 4
      %s44 = int_to_ptr.vmem [resolvable:$true] %s43
      %49 = dma.hbm_to_vmem [thread:$0]  %s6, 2048, %s44, [#allocation7], 128, 128, 8
    $region29: #{tpu_custom_call.1} parent=1 // pred_fallthru
      _
    // Predicated region
    $region30: #{tpu_custom_call.1} parent=1 // pred_check
      _
    $region31: #{tpu_custom_call.1} parent=1 // pred_check_branch
      %51 = sbr.rel (0) target = $region33
    $region32: #{tpu_custom_call.1} parent=1 // pred_region
      _
    $region33: #{tpu_custom_call.1} parent=1 // pred_fallthru
      _
    // Predicated region
    $region34: #{tpu_custom_call.1} parent=1 // pred_check
      _
    $region35: #{tpu_custom_call.1} parent=1 // pred_check_branch
      %53 = sbr.rel (0) target = $region37
    $region36: #{tpu_custom_call.1} parent=1 // pred_region
      %54 = dma.done [#allocation4], 3072
    $region37: #{tpu_custom_call.1} parent=1 // pred_fallthru
      _
    // Predicated region
    $region38: #{tpu_custom_call.1} parent=1 // pred_check
      _
    $region39: #{tpu_custom_call.1} parent=1 // pred_check_branch
      %56 = sbr.rel (0) target = $region41
    $region40: #{tpu_custom_call.1} parent=1 // pred_region
      %57 = dma.done [#allocation7], 2048
    $region41: #{tpu_custom_call.1} parent=1 // pred_fallthru
      _
    %v59 = vld [vmem:[%s0] sm:$0xf]
    %v60 = vld [vmem:[%s0 + $0x4] sm:$0xf]
    %v61 = vld [vmem:[%s0 + $0x8] sm:$0xf]
    %v62 = vld [vmem:[%s0 + $0xc] sm:$0xf]
    %v63 = vld [vmem:[%s0 + $0x10] sm:$0xf]
    %v64 = vld [vmem:[%s0 + $0x14] sm:$0xf]
    %v65 = vld [vmem:[%s0 + $0x18] sm:$0xf]
    %v66 = vld [vmem:[%s0 + $0x1c] sm:$0xf]
    %v67 = vld [vmem:[%s2] sm:$0xff]
    %v68 = vld [vmem:[%s2 + $0x8] sm:$0xf]
    %v69 = vld [vmem:[%s2 + $0xc] sm:$0xff]
    %v70 = vld [vmem:[%s2 + $0x14] sm:$0xf]
    %v71 = vld [vmem:[%s2 + $0x18] sm:$0xff]
    %v72 = vld [vmem:[%s2 + $0x20] sm:$0xf]
    %v73 = vld [vmem:[%s2 + $0x24] sm:$0xff]
    %v74 = vld [vmem:[%s2 + $0x2c] sm:$0xf]
    %v75 = vld [vmem:[%s4] sm:$0x7]
    %v77 = vlaneseq
    %v78 = vshrl.u32 %v77, 7
    %v79 = vsub.s32 0, %v78
    %v80 = vrot.slane %v75, %v79
    %v81 = vlaneseq
    %v82 = vshrl.u32 %v81, 7
    %v83 = vsub.s32 1, %v82
    %v84 = vrot.slane %v75, %v83
    %v85 = vlaneseq
    %v86 = vshrl.u32 %v85, 7
    %v87 = vsub.s32 2, %v86
    %v88 = vrot.slane %v75, %v87
    %v100 = vunpack.c.l.b16 %v59
    %v101 = vunpack.c.l.b16 %v60
    %v102 = vunpack.c.l.b16 %v61
    %v103 = vunpack.c.l.b16 %v62
    %v104 = vunpack.c.l.b16 %v63
    %v105 = vunpack.c.l.b16 %v64
    %v106 = vunpack.c.l.b16 %v65
    %v107 = vunpack.c.l.b16 %v66
    %v108 = vpack.c.b16 %v101, %v100
    %v109 = vpack.c.b16 %v103, %v102
    %v110 = vpack.c.b16 %v105, %v104
    %v111 = vpack.c.b16 %v107, %v106
    %v120 = vunpack.c.l.b16 %v67
    %v121 = vunpack.c.h.b16 %v67
    %v122 = vunpack.c.l.b16 %v68
    %v123 = vunpack.c.l.b16 %v69
    %v124 = vunpack.c.h.b16 %v69
    %v125 = vunpack.c.l.b16 %v70
    %v126 = vunpack.c.l.b16 %v71
    %v127 = vunpack.c.h.b16 %v71
    %v128 = vunpack.c.l.b16 %v72
    %v129 = vunpack.c.l.b16 %v73
    %v130 = vunpack.c.h.b16 %v73
    %v131 = vunpack.c.l.b16 %v74
    %v132 = vpack.c.b16 %v123, %v120
    %v133 = vpack.c.b16 %v124, %v121
    %v134 = vpack.c.b16 %v125, %v122
    %v135 = vpack.c.b16 %v129, %v126
    %v136 = vpack.c.b16 %v130, %v127
    %v137 = vpack.c.b16 %v131, %v128
    %vm144 = vcmask 261120
    %v146 = vsel %vm144, %v108, 0
    %v149 = vsel %vm144, %v109, 0
    %v152 = vsel %vm144, %v110, 0
    %v155 = vsel %vm144, %v111, 0
    %157 = vmatprep.subr.bf16.mxu0 %v133
    %158 = vmatpush1.bf16.msra.mxu0 %v132
    %159 = vmatprep.subr.bf16.mxu0 %v136
    %160 = vmatpush1.bf16.msra.mxu0 %v135
    %161 = vmatprep.subr.bf16.mxu0 0
    %162 = vmatpush1.bf16.msra.mxu0 0
    %163 = vmatprep.subr.bf16.mxu0 0
    %164 = vmatpush1.bf16.msra.mxu0 0
    %165 = vmatprep.subr.bf16.mxu0 0
    %166 = vmatpush1.bf16.msra.mxu0 0
    %167 = vmatprep.subr.bf16.mxu0 0
    %168 = vmatpush1.bf16.msra.mxu0 0
    %169 = vmatprep.subr.bf16.mxu0 0
    %170 = vmatpush1.bf16.msra.mxu0 0
    %171 = vmatprep.subr.bf16.mxu0 0
    %172 = vmatpush1.bf16.msra.mxu0 0
    %173 = vmatprep.subr.bf16.mxu0 0
    %174 = vmatpush1.bf16.msra.mxu0 0
    %175 = vmatprep.subr.bf16.mxu0 0
    %176 = vmatpush1.bf16.msra.mxu0 0
    %177 = vmatprep.subr.bf16.mxu0 0
    %178 = vmatpush1.bf16.msra.mxu0 0
    %179 = vmatprep.subr.bf16.mxu0 0
    %180 = vmatpush1.bf16.msra.mxu0 0
    %181 = vmatprep.subr.bf16.mxu0 0
    %182 = vmatpush1.bf16.msra.mxu0 0
    %183 = vmatprep.subr.bf16.mxu0 0
    %184 = vmatpush1.bf16.msra.mxu0 0
    %185 = vmatprep.subr.bf16.mxu0 0
    %186 = vmatpush1.bf16.msra.mxu0 0
    %187 = vmatprep.subr.bf16.mxu0 0
    %188 = vmatpush1.bf16.msra.mxu0 0
    %189 = vmatprep.mubr.bf16.mxu0 0
    %190 = vmatmul.mubr.bf16.gmra.mrb[0].mxu0 %v146
    %v191 = vpop.f32.mrb[0].mxu0
    %v192 = vadd.f32 %v80, %v191
    %v193 = vpop.f32.mrb[0].mxu0
    %v194 = vadd.f32 %v84, %v193
    %v195 = vpop.f32.mrb[0].mxu0
    %v196 = vadd.f32 %v80, %v195
    %v197 = vpop.f32.mrb[0].mxu0
    %v198 = vadd.f32 %v84, %v197
    %199 = vmatprep.mubr.bf16.mxu0 0
    %200 = vmatmul.mubr.bf16.gmra.mrb[0].mxu0 %v149
    %v201 = vpop.f32.mrb[0].mxu0
    %v202 = vadd.f32 %v80, %v201
    %v203 = vpop.f32.mrb[0].mxu0
    %v204 = vadd.f32 %v84, %v203
    %v205 = vpop.f32.mrb[0].mxu0
    %v206 = vadd.f32 %v80, %v205
    %v207 = vpop.f32.mrb[0].mxu0
    %v208 = vadd.f32 %v84, %v207
    %209 = vmatprep.mubr.bf16.mxu0 0
    %210 = vmatmul.mubr.bf16.gmra.mrb[0].mxu0 %v152
    %v211 = vpop.f32.mrb[0].mxu0
    %v212 = vadd.f32 %v80, %v211
    %v213 = vpop.f32.mrb[0].mxu0
    %v214 = vadd.f32 %v84, %v213
    %v215 = vpop.f32.mrb[0].mxu0
    %v216 = vadd.f32 %v80, %v215
    %v217 = vpop.f32.mrb[0].mxu0
    %v218 = vadd.f32 %v84, %v217
    %219 = vmatprep.mubr.bf16.mxu0 0
    %220 = vmatmul.mubr.bf16.gmra.mrb[0].mxu0 %v155
    %v221 = vpop.f32.mrb[0].mxu0
    %v222 = vadd.f32 %v80, %v221
    %v223 = vpop.f32.mrb[0].mxu0
    %v224 = vadd.f32 %v84, %v223
    %v225 = vpop.f32.mrb[0].mxu0
    %v226 = vadd.f32 %v80, %v225
    %v227 = vpop.f32.mrb[0].mxu0
    %v228 = vadd.f32 %v84, %v227
    %229 = vdwg.mxu0
    %230 = vmatprep.subr.bf16.mxu0 0
    %231 = vmatpush1.bf16.msra.mxu0 %v134
    %232 = vmatprep.subr.bf16.mxu0 0
    %233 = vmatpush1.bf16.msra.mxu0 %v137
    %234 = vmatprep.subr.bf16.mxu0 0
    %235 = vmatpush1.bf16.msra.mxu0 0
    %236 = vmatprep.subr.bf16.mxu0 0
    %237 = vmatpush1.bf16.msra.mxu0 0
    %238 = vmatprep.subr.bf16.mxu0 0
    %239 = vmatpush1.bf16.msra.mxu0 0
    %240 = vmatprep.subr.bf16.mxu0 0
    %241 = vmatpush1.bf16.msra.mxu0 0
    %242 = vmatprep.subr.bf16.mxu0 0
    %243 = vmatpush1.bf16.msra.mxu0 0
    %244 = vmatprep.subr.bf16.mxu0 0
    %245 = vmatpush1.bf16.msra.mxu0 0
    %246 = vmatprep.subr.bf16.mxu0 0
    %247 = vmatpush1.bf16.msra.mxu0 0
    %248 = vmatprep.subr.bf16.mxu0 0
    %249 = vmatpush1.bf16.msra.mxu0 0
    %250 = vmatprep.subr.bf16.mxu0 0
    %251 = vmatpush1.bf16.msra.mxu0 0
    %252 = vmatprep.subr.bf16.mxu0 0
    %253 = vmatpush1.bf16.msra.mxu0 0
    %254 = vmatprep.subr.bf16.mxu0 0
    %255 = vmatpush1.bf16.msra.mxu0 0
    %256 = vmatprep.subr.bf16.mxu0 0
    %257 = vmatpush1.bf16.msra.mxu0 0
    %258 = vmatprep.subr.bf16.mxu0 0
    %259 = vmatpush1.bf16.msra.mxu0 0
    %260 = vmatprep.subr.bf16.mxu0 0
    %261 = vmatpush1.bf16.msra.mxu0 0
    %262 = vmatprep.mubr.bf16.mxu0 0
    %263 = vmatmul.mubr.bf16.gmra.mrb[0].mxu0 %v146
    %v264 = vpop.f32.mrb[0].mxu0
    %v265 = vadd.f32 %v88, %v264
    %v266 = vpop.f32.mrb[0].mxu0
    %v267 = vpop.f32.mrb[0].mxu0
    %v268 = vadd.f32 %v88, %v267
    %v269 = vpop.f32.mrb[0].mxu0
    %270 = vmatprep.mubr.bf16.mxu0 0
    %271 = vmatmul.mubr.bf16.gmra.mrb[0].mxu0 %v149
    %v272 = vpop.f32.mrb[0].mxu0
    %v273 = vadd.f32 %v88, %v272
    %v274 = vpop.f32.mrb[0].mxu0
    %v275 = vpop.f32.mrb[0].mxu0
    %v276 = vadd.f32 %v88, %v275
    %v277 = vpop.f32.mrb[0].mxu0
    %278 = vmatprep.mubr.bf16.mxu0 0
    %279 = vmatmul.mubr.bf16.gmra.mrb[0].mxu0 %v152
    %v280 = vpop.f32.mrb[0].mxu0
    %v281 = vadd.f32 %v88, %v280
    %v282 = vpop.f32.mrb[0].mxu0
    %v283 = vpop.f32.mrb[0].mxu0
    %v284 = vadd.f32 %v88, %v283
    %v285 = vpop.f32.mrb[0].mxu0
    %286 = vmatprep.mubr.bf16.mxu0 0
    %287 = vmatmul.mubr.bf16.gmra.mrb[0].mxu0 %v155
    %v288 = vpop.f32.mrb[0].mxu0
    %v289 = vadd.f32 %v88, %v288
    %v290 = vpop.f32.mrb[0].mxu0
    %v291 = vpop.f32.mrb[0].mxu0
    %v292 = vadd.f32 %v88, %v291
    %v293 = vpop.f32.mrb[0].mxu0
    %294 = vdwg.mxu0
    %295 = vst [vmem:[#allocation2] sm:$0xff] %v192
    %296 = vst [vmem:[#allocation2 + $0x8] sm:$0xff] %v194
    %297 = vst [vmem:[#allocation2 + $0x10] sm:$0xff] %v265
    %298 = vst [vmem:[#allocation2 + $0x18] sm:$0xff] %v196
    %299 = vst [vmem:[#allocation2 + $0x20] sm:$0xff] %v198
    %300 = vst [vmem:[#allocation2 + $0x28] sm:$0xff] %v268
    %301 = vst [vmem:[#allocation2 + $0x30] sm:$0xff] %v202
    %302 = vst [vmem:[#allocation2 + $0x38] sm:$0xff] %v204
    %303 = vst [vmem:[#allocation2 + $0x40] sm:$0xff] %v273
    %304 = vst [vmem:[#allocation2 + $0x48] sm:$0xff] %v206
    %305 = vst [vmem:[#allocation2 + $0x50] sm:$0xff] %v208
    %306 = vst [vmem:[#allocation2 + $0x58] sm:$0xff] %v276
    %307 = vst [vmem:[#allocation2 + $0x60] sm:$0xff] %v212
    %308 = vst [vmem:[#allocation2 + $0x68] sm:$0xff] %v214
    %309 = vst [vmem:[#allocation2 + $0x70] sm:$0xff] %v281
    %310 = vst [vmem:[#allocation2 + $0x78] sm:$0xff] %v216
    %311 = vst [vmem:[#allocation2 + $0x80] sm:$0xff] %v218
    %312 = vst [vmem:[#allocation2 + $0x88] sm:$0xff] %v284
    %313 = vst [vmem:[#allocation2 + $0x90] sm:$0xff] %v222
    %314 = vst [vmem:[#allocation2 + $0x98] sm:$0xff] %v224
    %315 = vst [vmem:[#allocation2 + $0xa0] sm:$0xff] %v289
    %316 = vst [vmem:[#allocation2 + $0xa8] sm:$0xff] %v226
    %317 = vst [vmem:[#allocation2 + $0xb0] sm:$0xff] %v228
    %318 = vst [vmem:[#allocation2 + $0xb8] sm:$0xff] %v292
    %v319 = vld [vmem:[%s1] sm:$0xff]
    %v320 = vld [vmem:[#allocation3] sm:$0xff]
    %v321 = vld [vmem:[#allocation3 + $0x8] sm:$0xf]
    %v322 = vld [vmem:[#allocation3 + $0xc] sm:$0xff]
    %v323 = vld [vmem:[#allocation3 + $0x14] sm:$0xf]
    %v324 = vld [vmem:[#allocation3 + $0x18] sm:$0xff]
    %v325 = vld [vmem:[#allocation3 + $0x20] sm:$0xf]
    %v326 = vld [vmem:[#allocation3 + $0x24] sm:$0xff]
    %v327 = vld [vmem:[#allocation3 + $0x2c] sm:$0xf]
    %v328 = vld [vmem:[#allocation3 + $0x30] sm:$0xff]
    %v329 = vld [vmem:[#allocation3 + $0x38] sm:$0xf]
    %v330 = vld [vmem:[#allocation3 + $0x3c] sm:$0xff]
    %v331 = vld [vmem:[#allocation3 + $0x44] sm:$0xf]
    %v332 = vld [vmem:[#allocation3 + $0x48] sm:$0xff]
    %v333 = vld [vmem:[#allocation3 + $0x50] sm:$0xf]
    %v334 = vld [vmem:[#allocation3 + $0x54] sm:$0xff]
    %v335 = vld [vmem:[#allocation3 + $0x5c] sm:$0xf]
    %v336 = vld [vmem:[#allocation3 + $0x60] sm:$0xff]
    %v337 = vld [vmem:[#allocation3 + $0x68] sm:$0xf]
    %v338 = vld [vmem:[#allocation3 + $0x6c] sm:$0xff]
    %v339 = vld [vmem:[#allocation3 + $0x74] sm:$0xf]
    %v340 = vld [vmem:[#allocation3 + $0x78] sm:$0xff]
    %v341 = vld [vmem:[#allocation3 + $0x80] sm:$0xf]
    %v342 = vld [vmem:[#allocation3 + $0x84] sm:$0xff]
    %v343 = vld [vmem:[#allocation3 + $0x8c] sm:$0xf]
    %v344 = vld [vmem:[#allocation3 + $0x90] sm:$0xff]
    %v345 = vld [vmem:[#allocation3 + $0x98] sm:$0xf]
    %v346 = vld [vmem:[#allocation3 + $0x9c] sm:$0xff]
    %v347 = vld [vmem:[#allocation3 + $0xa4] sm:$0xf]
    %v348 = vld [vmem:[#allocation3 + $0xa8] sm:$0xff]
    %v349 = vld [vmem:[#allocation3 + $0xb0] sm:$0xf]
    %v350 = vld [vmem:[#allocation3 + $0xb4] sm:$0xff]
    %v351 = vld [vmem:[#allocation3 + $0xbc] sm:$0xf]
    %v352 = vld [vmem:[%s5] sm:$0x1]
    %s353 = smul.u32 0, 3
    %s354 = smul.addr %s353, 8
    %s355 = scalar_lea.vmem [#allocation2], %s354
    %v356 = vld [vmem:[%s355] sm:$0xff]
    %v357 = vld [vmem:[%s355 + $0x8] sm:$0xff]
    %v358 = vld [vmem:[%s355 + $0x10] sm:$0xff]
    %v391 = vunpack.c.l.b16 %v320
    %v392 = vunpack.c.h.b16 %v320
    %v393 = vunpack.c.l.b16 %v321
    %v394 = vunpack.c.l.b16 %v322
    %v395 = vunpack.c.h.b16 %v322
    %v396 = vunpack.c.l.b16 %v323
    %v397 = vunpack.c.l.b16 %v324
    %v398 = vunpack.c.h.b16 %v324
    %v399 = vunpack.c.l.b16 %v325
    %v400 = vunpack.c.l.b16 %v326
    %v401 = vunpack.c.h.b16 %v326
    %v402 = vunpack.c.l.b16 %v327
    %v403 = vunpack.c.l.b16 %v328
    %v404 = vunpack.c.h.b16 %v328
    %v405 = vunpack.c.l.b16 %v329
    %v406 = vunpack.c.l.b16 %v330
    %v407 = vunpack.c.h.b16 %v330
    %v408 = vunpack.c.l.b16 %v331
    %v409 = vunpack.c.l.b16 %v332
    %v410 = vunpack.c.h.b16 %v332
    %v411 = vunpack.c.l.b16 %v333
    %v412 = vunpack.c.l.b16 %v334
    %v413 = vunpack.c.h.b16 %v334
    %v414 = vunpack.c.l.b16 %v335
    %v415 = vunpack.c.l.b16 %v336
    %v416 = vunpack.c.h.b16 %v336
    %v417 = vunpack.c.l.b16 %v337
    %v418 = vunpack.c.l.b16 %v338
    %v419 = vunpack.c.h.b16 %v338
    %v420 = vunpack.c.l.b16 %v339
    %v421 = vunpack.c.l.b16 %v340
    %v422 = vunpack.c.h.b16 %v340
    %v423 = vunpack.c.l.b16 %v341
    %v424 = vunpack.c.l.b16 %v342
    %v425 = vunpack.c.h.b16 %v342
    %v426 = vunpack.c.l.b16 %v343
    %v427 = vunpack.c.l.b16 %v344
    %v428 = vunpack.c.h.b16 %v344
    %v429 = vunpack.c.l.b16 %v345
    %v430 = vunpack.c.l.b16 %v346
    %v431 = vunpack.c.h.b16 %v346
    %v432 = vunpack.c.l.b16 %v347
    %v433 = vunpack.c.l.b16 %v348
    %v434 = vunpack.c.h.b16 %v348
    %v435 = vunpack.c.l.b16 %v349
    %v436 = vunpack.c.l.b16 %v350
    %v437 = vunpack.c.h.b16 %v350
    %v438 = vunpack.c.l.b16 %v351
    %v439 = vpack.c.b16 %v394, %v391
    %v440 = vpack.c.b16 %v395, %v392
    %v441 = vpack.c.b16 %v396, %v393
    %v442 = vpack.c.b16 %v400, %v397
    %v443 = vpack.c.b16 %v401, %v398
    %v444 = vpack.c.b16 %v402, %v399
    %v445 = vpack.c.b16 %v406, %v403
    %v446 = vpack.c.b16 %v407, %v404
    %v447 = vpack.c.b16 %v408, %v405
    %v448 = vpack.c.b16 %v412, %v409
    %v449 = vpack.c.b16 %v413, %v410
    %v450 = vpack.c.b16 %v414, %v411
    %v451 = vpack.c.b16 %v418, %v415
    %v452 = vpack.c.b16 %v419, %v416
    %v453 = vpack.c.b16 %v420, %v417
    %v454 = vpack.c.b16 %v424, %v421
    %v455 = vpack.c.b16 %v425, %v422
    %v456 = vpack.c.b16 %v426, %v423
    %v457 = vpack.c.b16 %v430, %v427
    %v458 = vpack.c.b16 %v431, %v428
    %v459 = vpack.c.b16 %v432, %v429
    %v460 = vpack.c.b16 %v436, %v433
    %v461 = vpack.c.b16 %v437, %v434
    %v462 = vpack.c.b16 %v438, %v435
    %487 = vmatprep.subr.bf16.mxu0 %v440
    %488 = vmatpush1.bf16.msra.mxu0 %v439
    %489 = vmatprep.subr.bf16.mxu0 %v443
    %490 = vmatpush1.bf16.msra.mxu0 %v442
    %491 = vmatprep.subr.bf16.mxu0 %v446
    %492 = vmatpush1.bf16.msra.mxu0 %v445
    %493 = vmatprep.subr.bf16.mxu0 %v449
    %494 = vmatpush1.bf16.msra.mxu0 %v448
    %495 = vmatprep.subr.bf16.mxu0 %v452
    %496 = vmatpush1.bf16.msra.mxu0 %v451
    %497 = vmatprep.subr.bf16.mxu0 %v455
    %498 = vmatpush1.bf16.msra.mxu0 %v454
    %499 = vmatprep.subr.bf16.mxu0 %v458
    %500 = vmatpush1.bf16.msra.mxu0 %v457
    %501 = vmatprep.subr.bf16.mxu0 %v461
    %502 = vmatpush1.bf16.msra.mxu0 %v460
    %503 = vmatprep.subr.bf16.mxu0 0
    %504 = vmatpush1.bf16.msra.mxu0 0
    %505 = vmatprep.subr.bf16.mxu0 0
    %506 = vmatpush1.bf16.msra.mxu0 0
    %507 = vmatprep.subr.bf16.mxu0 0
    %508 = vmatpush1.bf16.msra.mxu0 0
    %509 = vmatprep.subr.bf16.mxu0 0
    %510 = vmatpush1.bf16.msra.mxu0 0
    %511 = vmatprep.subr.bf16.mxu0 0
    %512 = vmatpush1.bf16.msra.mxu0 0
    %513 = vmatprep.subr.bf16.mxu0 0
    %514 = vmatpush1.bf16.msra.mxu0 0
    %515 = vmatprep.subr.bf16.mxu0 0
    %516 = vmatpush1.bf16.msra.mxu0 0
    %517 = vmatprep.subr.bf16.mxu0 0
    %518 = vmatpush1.bf16.msra.mxu0 0
    %519 = vmatprep.mubr.bf16.mxu0 0
    %520 = vmatmul.mubr.bf16.gmra.mrb[0].mxu0 0
    %v521 = vpop.f32.mrb[0].mxu0
    %v522 = vadd.f32 0.0, %v521
    %v523 = vpop.f32.mrb[0].mxu0
    %v524 = vadd.f32 0.0, %v523
    %v525 = vpop.f32.mrb[0].mxu0
    %v526 = vpop.f32.mrb[0].mxu0
    %527 = vdwg.mxu0
    %528 = vmatprep.subr.bf16.mxu0 0
    %529 = vmatpush1.bf16.msra.mxu0 %v441
    %530 = vmatprep.subr.bf16.mxu0 0
    %531 = vmatpush1.bf16.msra.mxu0 %v444
    %532 = vmatprep.subr.bf16.mxu0 0
    %533 = vmatpush1.bf16.msra.mxu0 %v447
    %534 = vmatprep.subr.bf16.mxu0 0
    %535 = vmatpush1.bf16.msra.mxu0 %v450
    %536 = vmatprep.subr.bf16.mxu0 0
    %537 = vmatpush1.bf16.msra.mxu0 %v453
    %538 = vmatprep.subr.bf16.mxu0 0
    %539 = vmatpush1.bf16.msra.mxu0 %v456
    %540 = vmatprep.subr.bf16.mxu0 0
    %541 = vmatpush1.bf16.msra.mxu0 %v459
    %542 = vmatprep.subr.bf16.mxu0 0
    %543 = vmatpush1.bf16.msra.mxu0 %v462
    %544 = vmatprep.subr.bf16.mxu0 0
    %545 = vmatpush1.bf16.msra.mxu0 0
    %546 = vmatprep.subr.bf16.mxu0 0
    %547 = vmatpush1.bf16.msra.mxu0 0
    %548 = vmatprep.subr.bf16.mxu0 0
    %549 = vmatpush1.bf16.msra.mxu0 0
    %550 = vmatprep.subr.bf16.mxu0 0
    %551 = vmatpush1.bf16.msra.mxu0 0
    %552 = vmatprep.subr.bf16.mxu0 0
    %553 = vmatpush1.bf16.msra.mxu0 0
    %554 = vmatprep.subr.bf16.mxu0 0
    %555 = vmatpush1.bf16.msra.mxu0 0
    %556 = vmatprep.subr.bf16.mxu0 0
    %557 = vmatpush1.bf16.msra.mxu0 0
    %558 = vmatprep.subr.bf16.mxu0 0
    %559 = vmatpush1.bf16.msra.mxu0 0
    %560 = vmatprep.mubr.bf16.mxu0 0
    %561 = vmatmul.mubr.bf16.gmra.mrb[0].mxu0 0
    %v562 = vpop.f32.mrb[0].mxu0
    %v563 = vadd.f32 0.0, %v562
    %v564 = vpop.f32.mrb[0].mxu0
    %v565 = vpop.f32.mrb[0].mxu0
    %v566 = vpop.f32.mrb[0].mxu0
    %567 = vdwg.mxu0
    %v568 = vadd.f32 %v356, %v522
    %v569 = vxor.u32 %v568, 2147483648
    %v570 = vmul.f32 %v569, 1.442695
    %v571 = vpow.pop %v570
    %v572 = vadd.f32 %v571, 1.0
    %v573 = vrcp.pop %v572
    %v574 = vmul.f32 1.0, %v573
    %v575 = vadd.f32 %v357, %v524
    %v576 = vxor.u32 %v575, 2147483648
    %v577 = vmul.f32 %v576, 1.442695
    %v578 = vpow.pop %v577
    %v579 = vadd.f32 %v578, 1.0
    %v580 = vrcp.pop %v579
    %v581 = vmul.f32 1.0, %v580
    %v583 = vlaneseq
    %v584 = vshrl.u32 %v583, 7
    %v585 = vsub.s32 0, %v584
    %v586 = vrot.slane %v352, %v585
    %v588 = vadd.f32 %v563, %v586
    %v589 = vmul.f32 %v574, %v588
    %v590 = vadd.f32 %v358, %v589
    %v591 = vtanh.pop %v590
    %v592 = vsub.f32 1.0, %v581
    %v593 = vmul.f32 %v592, %v591
    %v594 = vmul.f32 %v581, 0.0
    %v595 = vadd.f32 %v593, %v594
    %vm596 = vcmp.gt.s32.totalorder %v319, 0
    %v597 = vsel %vm596, 1, 0
    %598 = vset.pattern.permute.xlu0 0
    %599 = vperm.xlu0 %598, %v597
    %v600 = vpop.permute.xlu0 %599
    %vm601 = vcmp.eq.s32.totalorder %v600, 1
    %v602 = vsel %vm601, %v595, 0.0
    %s603 = smul.u32 1, 3
    %s604 = smul.addr %s603, 8
    %s605 = scalar_lea.vmem [#allocation2], %s604
    %v606 = vld [vmem:[%s605] sm:$0xff]
    %v607 = vld [vmem:[%s605 + $0x8] sm:$0xff]
    %v608 = vld [vmem:[%s605 + $0x10] sm:$0xff]
    %v609 = vpack.c.bf16 %v602, %v602
    %610 = vmatprep.subr.bf16.mxu0 %v440
    %611 = vmatpush1.bf16.msra.mxu0 %v439
    %612 = vmatprep.subr.bf16.mxu0 %v443
    %613 = vmatpush1.bf16.msra.mxu0 %v442
    %614 = vmatprep.subr.bf16.mxu0 %v446
    %615 = vmatpush1.bf16.msra.mxu0 %v445
    %616 = vmatprep.subr.bf16.mxu0 %v449
    %617 = vmatpush1.bf16.msra.mxu0 %v448
    %618 = vmatprep.subr.bf16.mxu0 %v452
    %619 = vmatpush1.bf16.msra.mxu0 %v451
    %620 = vmatprep.subr.bf16.mxu0 %v455
    %621 = vmatpush1.bf16.msra.mxu0 %v454
    %622 = vmatprep.subr.bf16.mxu0 %v458
    %623 = vmatpush1.bf16.msra.mxu0 %v457
    %624 = vmatprep.subr.bf16.mxu0 %v461
    %625 = vmatpush1.bf16.msra.mxu0 %v460
    %626 = vmatprep.subr.bf16.mxu0 0
    %627 = vmatpush1.bf16.msra.mxu0 0
    %628 = vmatprep.subr.bf16.mxu0 0
    %629 = vmatpush1.bf16.msra.mxu0 0
    %630 = vmatprep.subr.bf16.mxu0 0
    %631 = vmatpush1.bf16.msra.mxu0 0
    %632 = vmatprep.subr.bf16.mxu0 0
    %633 = vmatpush1.bf16.msra.mxu0 0
    %634 = vmatprep.subr.bf16.mxu0 0
    %635 = vmatpush1.bf16.msra.mxu0 0
    %636 = vmatprep.subr.bf16.mxu0 0
    %637 = vmatpush1.bf16.msra.mxu0 0
    %638 = vmatprep.subr.bf16.mxu0 0
    %639 = vmatpush1.bf16.msra.mxu0 0
    %640 = vmatprep.subr.bf16.mxu0 0
    %641 = vmatpush1.bf16.msra.mxu0 0
    %642 = vmatprep.mubr.bf16.mxu0 0
    %643 = vmatmul.mubr.bf16.gmra.mrb[0].mxu0 %v609
    %v644 = vpop.f32.mrb[0].mxu0
    %v645 = vadd.f32 0.0, %v644
    %v646 = vpop.f32.mrb[0].mxu0
    %v647 = vadd.f32 0.0, %v646
    %v648 = vpop.f32.mrb[0].mxu0
    %v649 = vpop.f32.mrb[0].mxu0
    %650 = vdwg.mxu0
    %651 = vmatprep.subr.bf16.mxu0 0
    %652 = vmatpush1.bf16.msra.mxu0 %v441
    %653 = vmatprep.subr.bf16.mxu0 0
    %654 = vmatpush1.bf16.msra.mxu0 %v444
    %655 = vmatprep.subr.bf16.mxu0 0
    %656 = vmatpush1.bf16.msra.mxu0 %v447
    %657 = vmatprep.subr.bf16.mxu0 0
    %658 = vmatpush1.bf16.msra.mxu0 %v450
    %659 = vmatprep.subr.bf16.mxu0 0
    %660 = vmatpush1.bf16.msra.mxu0 %v453
    %661 = vmatprep.subr.bf16.mxu0 0
    %662 = vmatpush1.bf16.msra.mxu0 %v456
    %663 = vmatprep.subr.bf16.mxu0 0
    %664 = vmatpush1.bf16.msra.mxu0 %v459
    %665 = vmatprep.subr.bf16.mxu0 0
    %666 = vmatpush1.bf16.msra.mxu0 %v462
    %667 = vmatprep.subr.bf16.mxu0 0
    %668 = vmatpush1.bf16.msra.mxu0 0
    %669 = vmatprep.subr.bf16.mxu0 0
    %670 = vmatpush1.bf16.msra.mxu0 0
    %671 = vmatprep.subr.bf16.mxu0 0
    %672 = vmatpush1.bf16.msra.mxu0 0
    %673 = vmatprep.subr.bf16.mxu0 0
    %674 = vmatpush1.bf16.msra.mxu0 0
    %675 = vmatprep.subr.bf16.mxu0 0
    %676 = vmatpush1.bf16.msra.mxu0 0
    %677 = vmatprep.subr.bf16.mxu0 0
    %678 = vmatpush1.bf16.msra.mxu0 0
    %679 = vmatprep.subr.bf16.mxu0 0
    %680 = vmatpush1.bf16.msra.mxu0 0
    %681 = vmatprep.subr.bf16.mxu0 0
    %682 = vmatpush1.bf16.msra.mxu0 0
    %683 = vmatprep.mubr.bf16.mxu0 0
    %684 = vmatmul.mubr.bf16.gmra.mrb[0].mxu0 %v609
    %v685 = vpop.f32.mrb[0].mxu0
    %v686 = vadd.f32 0.0, %v685
    %v687 = vpop.f32.mrb[0].mxu0
    %v688 = vpop.f32.mrb[0].mxu0
    %v689 = vpop.f32.mrb[0].mxu0
    %690 = vdwg.mxu0
    %v691 = vadd.f32 %v606, %v645
    %v692 = vxor.u32 %v691, 2147483648
    %v693 = vmul.f32 %v692, 1.442695
    %v694 = vpow.pop %v693
    %v695 = vadd.f32 %v694, 1.0
    %v696 = vrcp.pop %v695
    %v697 = vmul.f32 1.0, %v696
    %v698 = vadd.f32 %v607, %v647
    %v699 = vxor.u32 %v698, 2147483648
    %v700 = vmul.f32 %v699, 1.442695
    %v701 = vpow.pop %v700
    %v702 = vadd.f32 %v701, 1.0
    %v703 = vrcp.pop %v702
    %v704 = vmul.f32 1.0, %v703
    %v705 = vadd.f32 %v686, %v586
    %v706 = vmul.f32 %v697, %v705
    %v707 = vadd.f32 %v608, %v706
    %v708 = vtanh.pop %v707
    %v709 = vsub.f32 1.0, %v704
    %v710 = vmul.f32 %v709, %v708
    %v711 = vmul.f32 %v704, %v602
    %v712 = vadd.f32 %v710, %v711
    %vm713 = vcmp.gt.s32.totalorder %v319, 1
    %v714 = vsel %vm713, 1, 0
    %715 = vset.pattern.permute.xlu0 0
    %716 = vperm.xlu0 %715, %v714
    %v717 = vpop.permute.xlu0 %716
    %vm718 = vcmp.eq.s32.totalorder %v717, 1
    %v719 = vsel %vm718, %v712, %v602
    %s720 = smul.u32 2, 3
    %s721 = smul.addr %s720, 8
    %s722 = scalar_lea.vmem [#allocation2], %s721
    %v723 = vld [vmem:[%s722] sm:$0xff]
    %v724 = vld [vmem:[%s722 + $0x8] sm:$0xff]
    %v725 = vld [vmem:[%s722 + $0x10] sm:$0xff]
    %v726 = vpack.c.bf16 %v719, %v719
    %727 = vmatprep.subr.bf16.mxu0 %v440
    %728 = vmatpush1.bf16.msra.mxu0 %v439
    %729 = vmatprep.subr.bf16.mxu0 %v443
    %730 = vmatpush1.bf16.msra.mxu0 %v442
    %731 = vmatprep.subr.bf16.mxu0 %v446
    %732 = vmatpush1.bf16.msra.mxu0 %v445
    %733 = vmatprep.subr.bf16.mxu0 %v449
    %734 = vmatpush1.bf16.msra.mxu0 %v448
    %735 = vmatprep.subr.bf16.mxu0 %v452
    %736 = vmatpush1.bf16.msra.mxu0 %v451
    %737 = vmatprep.subr.bf16.mxu0 %v455
    %738 = vmatpush1.bf16.msra.mxu0 %v454
    %739 = vmatprep.subr.bf16.mxu0 %v458
    %740 = vmatpush1.bf16.msra.mxu0 %v457
    %741 = vmatprep.subr.bf16.mxu0 %v461
    %742 = vmatpush1.bf16.msra.mxu0 %v460
    %743 = vmatprep.subr.bf16.mxu0 0
    %744 = vmatpush1.bf16.msra.mxu0 0
    %745 = vmatprep.subr.bf16.mxu0 0
    %746 = vmatpush1.bf16.msra.mxu0 0
    %747 = vmatprep.subr.bf16.mxu0 0
    %748 = vmatpush1.bf16.msra.mxu0 0
    %749 = vmatprep.subr.bf16.mxu0 0
    %750 = vmatpush1.bf16.msra.mxu0 0
    %751 = vmatprep.subr.bf16.mxu0 0
    %752 = vmatpush1.bf16.msra.mxu0 0
    %753 = vmatprep.subr.bf16.mxu0 0
    %754 = vmatpush1.bf16.msra.mxu0 0
    %755 = vmatprep.subr.bf16.mxu0 0
    %756 = vmatpush1.bf16.msra.mxu0 0
    %757 = vmatprep.subr.bf16.mxu0 0
    %758 = vmatpush1.bf16.msra.mxu0 0
    %759 = vmatprep.mubr.bf16.mxu0 0
    %760 = vmatmul.mubr.bf16.gmra.mrb[0].mxu0 %v726
    %v761 = vpop.f32.mrb[0].mxu0
    %v762 = vadd.f32 0.0, %v761
    %v763 = vpop.f32.mrb[0].mxu0
    %v764 = vadd.f32 0.0, %v763
    %v765 = vpop.f32.mrb[0].mxu0
    %v766 = vpop.f32.mrb[0].mxu0
    %767 = vdwg.mxu0
    %768 = vmatprep.subr.bf16.mxu0 0
    %769 = vmatpush1.bf16.msra.mxu0 %v441
    %770 = vmatprep.subr.bf16.mxu0 0
    %771 = vmatpush1.bf16.msra.mxu0 %v444
    %772 = vmatprep.subr.bf16.mxu0 0
    %773 = vmatpush1.bf16.msra.mxu0 %v447
    %774 = vmatprep.subr.bf16.mxu0 0
    %775 = vmatpush1.bf16.msra.mxu0 %v450
    %776 = vmatprep.subr.bf16.mxu0 0
    %777 = vmatpush1.bf16.msra.mxu0 %v453
    %778 = vmatprep.subr.bf16.mxu0 0
    %779 = vmatpush1.bf16.msra.mxu0 %v456
    %780 = vmatprep.subr.bf16.mxu0 0
    %781 = vmatpush1.bf16.msra.mxu0 %v459
    %782 = vmatprep.subr.bf16.mxu0 0
    %783 = vmatpush1.bf16.msra.mxu0 %v462
    %784 = vmatprep.subr.bf16.mxu0 0
    %785 = vmatpush1.bf16.msra.mxu0 0
    %786 = vmatprep.subr.bf16.mxu0 0
    %787 = vmatpush1.bf16.msra.mxu0 0
    %788 = vmatprep.subr.bf16.mxu0 0
    %789 = vmatpush1.bf16.msra.mxu0 0
    %790 = vmatprep.subr.bf16.mxu0 0
    %791 = vmatpush1.bf16.msra.mxu0 0
    %792 = vmatprep.subr.bf16.mxu0 0
    %793 = vmatpush1.bf16.msra.mxu0 0
    %794 = vmatprep.subr.bf16.mxu0 0
    %795 = vmatpush1.bf16.msra.mxu0 0
    %796 = vmatprep.subr.bf16.mxu0 0
    %797 = vmatpush1.bf16.msra.mxu0 0
    %798 = vmatprep.subr.bf16.mxu0 0
    %799 = vmatpush1.bf16.msra.mxu0 0
    %800 = vmatprep.mubr.bf16.mxu0 0
    %801 = vmatmul.mubr.bf16.gmra.mrb[0].mxu0 %v726
    %v802 = vpop.f32.mrb[0].mxu0
    %v803 = vadd.f32 0.0, %v802
    %v804 = vpop.f32.mrb[0].mxu0
    %v805 = vpop.f32.mrb[0].mxu0
    %v806 = vpop.f32.mrb[0].mxu0
    %807 = vdwg.mxu0
    %v808 = vadd.f32 %v723, %v762
    %v809 = vxor.u32 %v808, 2147483648
    %v810 = vmul.f32 %v809, 1.442695
    %v811 = vpow.pop %v810
    %v812 = vadd.f32 %v811, 1.0
    %v813 = vrcp.pop %v812
    %v814 = vmul.f32 1.0, %v813
    %v815 = vadd.f32 %v724, %v764
    %v816 = vxor.u32 %v815, 2147483648
    %v817 = vmul.f32 %v816, 1.442695
    %v818 = vpow.pop %v817
    %v819 = vadd.f32 %v818, 1.0
    %v820 = vrcp.pop %v819
    %v821 = vmul.f32 1.0, %v820
    %v822 = vadd.f32 %v803, %v586
    %v823 = vmul.f32 %v814, %v822
    %v824 = vadd.f32 %v725, %v823
    %v825 = vtanh.pop %v824
    %v826 = vsub.f32 1.0, %v821
    %v827 = vmul.f32 %v826, %v825
    %v828 = vmul.f32 %v821, %v719
    %v829 = vadd.f32 %v827, %v828
    %vm830 = vcmp.gt.s32.totalorder %v319, 2
    %v831 = vsel %vm830, 1, 0
    %832 = vset.pattern.permute.xlu0 0
    %833 = vperm.xlu0 %832, %v831
    %v834 = vpop.permute.xlu0 %833
    %vm835 = vcmp.eq.s32.totalorder %v834, 1
    %v836 = vsel %vm835, %v829, %v719
    %s837 = smul.u32 3, 3
    %s838 = smul.addr %s837, 8
    %s839 = scalar_lea.vmem [#allocation2], %s838
    %v840 = vld [vmem:[%s839] sm:$0xff]
    %v841 = vld [vmem:[%s839 + $0x8] sm:$0xff]
    %v842 = vld [vmem:[%s839 + $0x10] sm:$0xff]
    %v843 = vpack.c.bf16 %v836, %v836
    %844 = vmatprep.subr.bf16.mxu0 %v440
    %845 = vmatpush1.bf16.msra.mxu0 %v439
    %846 = vmatprep.subr.bf16.mxu0 %v443
    %847 = vmatpush1.bf16.msra.mxu0 %v442
    %848 = vmatprep.subr.bf16.mxu0 %v446
    %849 = vmatpush1.bf16.msra.mxu0 %v445
    %850 = vmatprep.subr.bf16.mxu0 %v449
    %851 = vmatpush1.bf16.msra.mxu0 %v448
    %852 = vmatprep.subr.bf16.mxu0 %v452
    %853 = vmatpush1.bf16.msra.mxu0 %v451
    %854 = vmatprep.subr.bf16.mxu0 %v455
    %855 = vmatpush1.bf16.msra.mxu0 %v454
    %856 = vmatprep.subr.bf16.mxu0 %v458
    %857 = vmatpush1.bf16.msra.mxu0 %v457
    %858 = vmatprep.subr.bf16.mxu0 %v461
    %859 = vmatpush1.bf16.msra.mxu0 %v460
    %860 = vmatprep.subr.bf16.mxu0 0
    %861 = vmatpush1.bf16.msra.mxu0 0
    %862 = vmatprep.subr.bf16.mxu0 0
    %863 = vmatpush1.bf16.msra.mxu0 0
    %864 = vmatprep.subr.bf16.mxu0 0
    %865 = vmatpush1.bf16.msra.mxu0 0
    %866 = vmatprep.subr.bf16.mxu0 0
    %867 = vmatpush1.bf16.msra.mxu0 0
    %868 = vmatprep.subr.bf16.mxu0 0
    %869 = vmatpush1.bf16.msra.mxu0 0
    %870 = vmatprep.subr.bf16.mxu0 0
    %871 = vmatpush1.bf16.msra.mxu0 0
    %872 = vmatprep.subr.bf16.mxu0 0
    %873 = vmatpush1.bf16.msra.mxu0 0
    %874 = vmatprep.subr.bf16.mxu0 0
    %875 = vmatpush1.bf16.msra.mxu0 0
    %876 = vmatprep.mubr.bf16.mxu0 0
    %877 = vmatmul.mubr.bf16.gmra.mrb[0].mxu0 %v843
    %v878 = vpop.f32.mrb[0].mxu0
    %v879 = vadd.f32 0.0, %v878
    %v880 = vpop.f32.mrb[0].mxu0
    %v881 = vadd.f32 0.0, %v880
    %v882 = vpop.f32.mrb[0].mxu0
    %v883 = vpop.f32.mrb[0].mxu0
    %884 = vdwg.mxu0
    %885 = vmatprep.subr.bf16.mxu0 0
    %886 = vmatpush1.bf16.msra.mxu0 %v441
    %887 = vmatprep.subr.bf16.mxu0 0
    %888 = vmatpush1.bf16.msra.mxu0 %v444
    %889 = vmatprep.subr.bf16.mxu0 0
    %890 = vmatpush1.bf16.msra.mxu0 %v447
    %891 = vmatprep.subr.bf16.mxu0 0
    %892 = vmatpush1.bf16.msra.mxu0 %v450
    %893 = vmatprep.subr.bf16.mxu0 0
    %894 = vmatpush1.bf16.msra.mxu0 %v453
    %895 = vmatprep.subr.bf16.mxu0 0
    %896 = vmatpush1.bf16.msra.mxu0 %v456
    %897 = vmatprep.subr.bf16.mxu0 0
    %898 = vmatpush1.bf16.msra.mxu0 %v459
    %899 = vmatprep.subr.bf16.mxu0 0
    %900 = vmatpush1.bf16.msra.mxu0 %v462
    %901 = vmatprep.subr.bf16.mxu0 0
    %902 = vmatpush1.bf16.msra.mxu0 0
    %903 = vmatprep.subr.bf16.mxu0 0
    %904 = vmatpush1.bf16.msra.mxu0 0
    %905 = vmatprep.subr.bf16.mxu0 0
    %906 = vmatpush1.bf16.msra.mxu0 0
    %907 = vmatprep.subr.bf16.mxu0 0
    %908 = vmatpush1.bf16.msra.mxu0 0
    %909 = vmatprep.subr.bf16.mxu0 0
    %910 = vmatpush1.bf16.msra.mxu0 0
    %911 = vmatprep.subr.bf16.mxu0 0
    %912 = vmatpush1.bf16.msra.mxu0 0
    %913 = vmatprep.subr.bf16.mxu0 0
    %914 = vmatpush1.bf16.msra.mxu0 0
    %915 = vmatprep.subr.bf16.mxu0 0
    %916 = vmatpush1.bf16.msra.mxu0 0
    %917 = vmatprep.mubr.bf16.mxu0 0
    %918 = vmatmul.mubr.bf16.gmra.mrb[0].mxu0 %v843
    %v919 = vpop.f32.mrb[0].mxu0
    %v920 = vadd.f32 0.0, %v919
    %v921 = vpop.f32.mrb[0].mxu0
    %v922 = vpop.f32.mrb[0].mxu0
    %v923 = vpop.f32.mrb[0].mxu0
    %924 = vdwg.mxu0
    %v925 = vadd.f32 %v840, %v879
    %v926 = vxor.u32 %v925, 2147483648
    %v927 = vmul.f32 %v926, 1.442695
    %v928 = vpow.pop %v927
    %v929 = vadd.f32 %v928, 1.0
    %v930 = vrcp.pop %v929
    %v931 = vmul.f32 1.0, %v930
    %v932 = vadd.f32 %v841, %v881
    %v933 = vxor.u32 %v932, 2147483648
    %v934 = vmul.f32 %v933, 1.442695
    %v935 = vpow.pop %v934
    %v936 = vadd.f32 %v935, 1.0
    %v937 = vrcp.pop %v936
    %v938 = vmul.f32 1.0, %v937
    %v939 = vadd.f32 %v920, %v586
    %v940 = vmul.f32 %v931, %v939
    %v941 = vadd.f32 %v842, %v940
    %v942 = vtanh.pop %v941
    %v943 = vsub.f32 1.0, %v938
    %v944 = vmul.f32 %v943, %v942
    %v945 = vmul.f32 %v938, %v836
    %v946 = vadd.f32 %v944, %v945
    %vm947 = vcmp.gt.s32.totalorder %v319, 3
    %v948 = vsel %vm947, 1, 0
    %949 = vset.pattern.permute.xlu0 0
    %950 = vperm.xlu0 %949, %v948
    %v951 = vpop.permute.xlu0 %950
    %vm952 = vcmp.eq.s32.totalorder %v951, 1
    %v953 = vsel %vm952, %v946, %v836
    %s954 = smul.u32 4, 3
    %s955 = smul.addr %s954, 8
    %s956 = scalar_lea.vmem [#allocation2], %s955
    %v957 = vld [vmem:[%s956] sm:$0xff]
    %v958 = vld [vmem:[%s956 + $0x8] sm:$0xff]
    %v959 = vld [vmem:[%s956 + $0x10] sm:$0xff]
    %v960 = vpack.c.bf16 %v953, %v953
    %961 = vmatprep.subr.bf16.mxu0 %v440
    %962 = vmatpush1.bf16.msra.mxu0 %v439
    %963 = vmatprep.subr.bf16.mxu0 %v443
    %964 = vmatpush1.bf16.msra.mxu0 %v442
    %965 = vmatprep.subr.bf16.mxu0 %v446
    %966 = vmatpush1.bf16.msra.mxu0 %v445
    %967 = vmatprep.subr.bf16.mxu0 %v449
    %968 = vmatpush1.bf16.msra.mxu0 %v448
    %969 = vmatprep.subr.bf16.mxu0 %v452
    %970 = vmatpush1.bf16.msra.mxu0 %v451
    %971 = vmatprep.subr.bf16.mxu0 %v455
    %972 = vmatpush1.bf16.msra.mxu0 %v454
    %973 = vmatprep.subr.bf16.mxu0 %v458
    %974 = vmatpush1.bf16.msra.mxu0 %v457
    %975 = vmatprep.subr.bf16.mxu0 %v461
    %976 = vmatpush1.bf16.msra.mxu0 %v460
    %977 = vmatprep.subr.bf16.mxu0 0
    %978 = vmatpush1.bf16.msra.mxu0 0
    %979 = vmatprep.subr.bf16.mxu0 0
    %980 = vmatpush1.bf16.msra.mxu0 0
    %981 = vmatprep.subr.bf16.mxu0 0
    %982 = vmatpush1.bf16.msra.mxu0 0
    %983 = vmatprep.subr.bf16.mxu0 0
    %984 = vmatpush1.bf16.msra.mxu0 0
    %985 = vmatprep.subr.bf16.mxu0 0
    %986 = vmatpush1.bf16.msra.mxu0 0
    %987 = vmatprep.subr.bf16.mxu0 0
    %988 = vmatpush1.bf16.msra.mxu0 0
    %989 = vmatprep.subr.bf16.mxu0 0
    %990 = vmatpush1.bf16.msra.mxu0 0
    %991 = vmatprep.subr.bf16.mxu0 0
    %992 = vmatpush1.bf16.msra.mxu0 0
    %993 = vmatprep.mubr.bf16.mxu0 0
    %994 = vmatmul.mubr.bf16.gmra.mrb[0].mxu0 %v960
    %v995 = vpop.f32.mrb[0].mxu0
    %v996 = vadd.f32 0.0, %v995
    %v997 = vpop.f32.mrb[0].mxu0
    %v998 = vadd.f32 0.0, %v997
    %v999 = vpop.f32.mrb[0].mxu0
    %v1000 = vpop.f32.mrb[0].mxu0
    %1001 = vdwg.mxu0
    %1002 = vmatprep.subr.bf16.mxu0 0
    %1003 = vmatpush1.bf16.msra.mxu0 %v441
    %1004 = vmatprep.subr.bf16.mxu0 0
    %1005 = vmatpush1.bf16.msra.mxu0 %v444
    %1006 = vmatprep.subr.bf16.mxu0 0
    %1007 = vmatpush1.bf16.msra.mxu0 %v447
    %1008 = vmatprep.subr.bf16.mxu0 0
    %1009 = vmatpush1.bf16.msra.mxu0 %v450
    %1010 = vmatprep.subr.bf16.mxu0 0
    %1011 = vmatpush1.bf16.msra.mxu0 %v453
    %1012 = vmatprep.subr.bf16.mxu0 0
    %1013 = vmatpush1.bf16.msra.mxu0 %v456
    %1014 = vmatprep.subr.bf16.mxu0 0
    %1015 = vmatpush1.bf16.msra.mxu0 %v459
    %1016 = vmatprep.subr.bf16.mxu0 0
    %1017 = vmatpush1.bf16.msra.mxu0 %v462
    %1018 = vmatprep.subr.bf16.mxu0 0
    %1019 = vmatpush1.bf16.msra.mxu0 0
    %1020 = vmatprep.subr.bf16.mxu0 0
    %1021 = vmatpush1.bf16.msra.mxu0 0
    %1022 = vmatprep.subr.bf16.mxu0 0
    %1023 = vmatpush1.bf16.msra.mxu0 0
    %1024 = vmatprep.subr.bf16.mxu0 0
    %1025 = vmatpush1.bf16.msra.mxu0 0
    %1026 = vmatprep.subr.bf16.mxu0 0
    %1027 = vmatpush1.bf16.msra.mxu0 0
    %1028 = vmatprep.subr.bf16.mxu0 0
    %1029 = vmatpush1.bf16.msra.mxu0 0
    %1030 = vmatprep.subr.bf16.mxu0 0
    %1031 = vmatpush1.bf16.msra.mxu0 0
    %1032 = vmatprep.subr.bf16.mxu0 0
    %1033 = vmatpush1.bf16.msra.mxu0 0
    %1034 = vmatprep.mubr.bf16.mxu0 0
    %1035 = vmatmul.mubr.bf16.gmra.mrb[0].mxu0 %v960
    %v1036 = vpop.f32.mrb[0].mxu0
    %v1037 = vadd.f32 0.0, %v1036
    %v1038 = vpop.f32.mrb[0].mxu0
    %v1039 = vpop.f32.mrb[0].mxu0
    %v1040 = vpop.f32.mrb[0].mxu0
    %1041 = vdwg.mxu0
    %v1042 = vadd.f32 %v957, %v996
    %v1043 = vxor.u32 %v1042, 2147483648
    %v1044 = vmul.f32 %v1043, 1.442695
    %v1045 = vpow.pop %v1044
    %v1046 = vadd.f32 %v1045, 1.0
    %v1047 = vrcp.pop %v1046
    %v1048 = vmul.f32 1.0, %v1047
    %v1049 = vadd.f32 %v958, %v998
    %v1050 = vxor.u32 %v1049, 2147483648
    %v1051 = vmul.f32 %v1050, 1.442695
    %v1052 = vpow.pop %v1051
    %v1053 = vadd.f32 %v1052, 1.0
    %v1054 = vrcp.pop %v1053
    %v1055 = vmul.f32 1.0, %v1054
    %v1056 = vadd.f32 %v1037, %v586
    %v1057 = vmul.f32 %v1048, %v1056
    %v1058 = vadd.f32 %v959, %v1057
    %v1059 = vtanh.pop %v1058
    %v1060 = vsub.f32 1.0, %v1055
    %v1061 = vmul.f32 %v1060, %v1059
    %v1062 = vmul.f32 %v1055, %v953
    %v1063 = vadd.f32 %v1061, %v1062
    %vm1064 = vcmp.gt.s32.totalorder %v319, 4
    %v1065 = vsel %vm1064, 1, 0
    %1066 = vset.pattern.permute.xlu0 0
    %1067 = vperm.xlu0 %1066, %v1065
    %v1068 = vpop.permute.xlu0 %1067
    %vm1069 = vcmp.eq.s32.totalorder %v1068, 1
    %v1070 = vsel %vm1069, %v1063, %v953
    %s1071 = smul.u32 5, 3
    %s1072 = smul.addr %s1071, 8
    %s1073 = scalar_lea.vmem [#allocation2], %s1072
    %v1074 = vld [vmem:[%s1073] sm:$0xff]
    %v1075 = vld [vmem:[%s1073 + $0x8] sm:$0xff]
    %v1076 = vld [vmem:[%s1073 + $0x10] sm:$0xff]
    %v1077 = vpack.c.bf16 %v1070, %v1070
    %1078 = vmatprep.subr.bf16.mxu0 %v440
    %1079 = vmatpush1.bf16.msra.mxu0 %v439
    %1080 = vmatprep.subr.bf16.mxu0 %v443
    %1081 = vmatpush1.bf16.msra.mxu0 %v442
    %1082 = vmatprep.subr.bf16.mxu0 %v446
    %1083 = vmatpush1.bf16.msra.mxu0 %v445
    %1084 = vmatprep.subr.bf16.mxu0 %v449
    %1085 = vmatpush1.bf16.msra.mxu0 %v448
    %1086 = vmatprep.subr.bf16.mxu0 %v452
    %1087 = vmatpush1.bf16.msra.mxu0 %v451
    %1088 = vmatprep.subr.bf16.mxu0 %v455
    %1089 = vmatpush1.bf16.msra.mxu0 %v454
    %1090 = vmatprep.subr.bf16.mxu0 %v458
    %1091 = vmatpush1.bf16.msra.mxu0 %v457
    %1092 = vmatprep.subr.bf16.mxu0 %v461
    %1093 = vmatpush1.bf16.msra.mxu0 %v460
    %1094 = vmatprep.subr.bf16.mxu0 0
    %1095 = vmatpush1.bf16.msra.mxu0 0
    %1096 = vmatprep.subr.bf16.mxu0 0
    %1097 = vmatpush1.bf16.msra.mxu0 0
    %1098 = vmatprep.subr.bf16.mxu0 0
    %1099 = vmatpush1.bf16.msra.mxu0 0
    %1100 = vmatprep.subr.bf16.mxu0 0
    %1101 = vmatpush1.bf16.msra.mxu0 0
    %1102 = vmatprep.subr.bf16.mxu0 0
    %1103 = vmatpush1.bf16.msra.mxu0 0
    %1104 = vmatprep.subr.bf16.mxu0 0
    %1105 = vmatpush1.bf16.msra.mxu0 0
    %1106 = vmatprep.subr.bf16.mxu0 0
    %1107 = vmatpush1.bf16.msra.mxu0 0
    %1108 = vmatprep.subr.bf16.mxu0 0
    %1109 = vmatpush1.bf16.msra.mxu0 0
    %1110 = vmatprep.mubr.bf16.mxu0 0
    %1111 = vmatmul.mubr.bf16.gmra.mrb[0].mxu0 %v1077
    %v1112 = vpop.f32.mrb[0].mxu0
    %v1113 = vadd.f32 0.0, %v1112
    %v1114 = vpop.f32.mrb[0].mxu0
    %v1115 = vadd.f32 0.0, %v1114
    %v1116 = vpop.f32.mrb[0].mxu0
    %v1117 = vpop.f32.mrb[0].mxu0
    %1118 = vdwg.mxu0
    %1119 = vmatprep.subr.bf16.mxu0 0
    %1120 = vmatpush1.bf16.msra.mxu0 %v441
    %1121 = vmatprep.subr.bf16.mxu0 0
    %1122 = vmatpush1.bf16.msra.mxu0 %v444
    %1123 = vmatprep.subr.bf16.mxu0 0
    %1124 = vmatpush1.bf16.msra.mxu0 %v447
    %1125 = vmatprep.subr.bf16.mxu0 0
    %1126 = vmatpush1.bf16.msra.mxu0 %v450
    %1127 = vmatprep.subr.bf16.mxu0 0
    %1128 = vmatpush1.bf16.msra.mxu0 %v453
    %1129 = vmatprep.subr.bf16.mxu0 0
    %1130 = vmatpush1.bf16.msra.mxu0 %v456
    %1131 = vmatprep.subr.bf16.mxu0 0
    %1132 = vmatpush1.bf16.msra.mxu0 %v459
    %1133 = vmatprep.subr.bf16.mxu0 0
    %1134 = vmatpush1.bf16.msra.mxu0 %v462
    %1135 = vmatprep.subr.bf16.mxu0 0
    %1136 = vmatpush1.bf16.msra.mxu0 0
    %1137 = vmatprep.subr.bf16.mxu0 0
    %1138 = vmatpush1.bf16.msra.mxu0 0
    %1139 = vmatprep.subr.bf16.mxu0 0
    %1140 = vmatpush1.bf16.msra.mxu0 0
    %1141 = vmatprep.subr.bf16.mxu0 0
    %1142 = vmatpush1.bf16.msra.mxu0 0
    %1143 = vmatprep.subr.bf16.mxu0 0
    %1144 = vmatpush1.bf16.msra.mxu0 0
    %1145 = vmatprep.subr.bf16.mxu0 0
    %1146 = vmatpush1.bf16.msra.mxu0 0
    %1147 = vmatprep.subr.bf16.mxu0 0
    %1148 = vmatpush1.bf16.msra.mxu0 0
    %1149 = vmatprep.subr.bf16.mxu0 0
    %1150 = vmatpush1.bf16.msra.mxu0 0
    %1151 = vmatprep.mubr.bf16.mxu0 0
    %1152 = vmatmul.mubr.bf16.gmra.mrb[0].mxu0 %v1077
    %v1153 = vpop.f32.mrb[0].mxu0
    %v1154 = vadd.f32 0.0, %v1153
    %v1155 = vpop.f32.mrb[0].mxu0
    %v1156 = vpop.f32.mrb[0].mxu0
    %v1157 = vpop.f32.mrb[0].mxu0
    %1158 = vdwg.mxu0
    %v1159 = vadd.f32 %v1074, %v1113
    %v1160 = vxor.u32 %v1159, 2147483648
    %v1161 = vmul.f32 %v1160, 1.442695
    %v1162 = vpow.pop %v1161
    %v1163 = vadd.f32 %v1162, 1.0
    %v1164 = vrcp.pop %v1163
    %v1165 = vmul.f32 1.0, %v1164
    %v1166 = vadd.f32 %v1075, %v1115
    %v1167 = vxor.u32 %v1166, 2147483648
    %v1168 = vmul.f32 %v1167, 1.442695
    %v1169 = vpow.pop %v1168
    %v1170 = vadd.f32 %v1169, 1.0
    %v1171 = vrcp.pop %v1170
    %v1172 = vmul.f32 1.0, %v1171
    %v1173 = vadd.f32 %v1154, %v586
    %v1174 = vmul.f32 %v1165, %v1173
    %v1175 = vadd.f32 %v1076, %v1174
    %v1176 = vtanh.pop %v1175
    %v1177 = vsub.f32 1.0, %v1172
    %v1178 = vmul.f32 %v1177, %v1176
    %v1179 = vmul.f32 %v1172, %v1070
    %v1180 = vadd.f32 %v1178, %v1179
    %vm1181 = vcmp.gt.s32.totalorder %v319, 5
    %v1182 = vsel %vm1181, 1, 0
    %1183 = vset.pattern.permute.xlu0 0
    %1184 = vperm.xlu0 %1183, %v1182
    %v1185 = vpop.permute.xlu0 %1184
    %vm1186 = vcmp.eq.s32.totalorder %v1185, 1
    %v1187 = vsel %vm1186, %v1180, %v1070
    %s1188 = smul.u32 6, 3
    %s1189 = smul.addr %s1188, 8
    %s1190 = scalar_lea.vmem [#allocation2], %s1189
    %v1191 = vld [vmem:[%s1190] sm:$0xff]
    %v1192 = vld [vmem:[%s1190 + $0x8] sm:$0xff]
    %v1193 = vld [vmem:[%s1190 + $0x10] sm:$0xff]
    %v1194 = vpack.c.bf16 %v1187, %v1187
    %1195 = vmatprep.subr.bf16.mxu0 %v440
    %1196 = vmatpush1.bf16.msra.mxu0 %v439
    %1197 = vmatprep.subr.bf16.mxu0 %v443
    %1198 = vmatpush1.bf16.msra.mxu0 %v442
    %1199 = vmatprep.subr.bf16.mxu0 %v446
    %1200 = vmatpush1.bf16.msra.mxu0 %v445
    %1201 = vmatprep.subr.bf16.mxu0 %v449
    %1202 = vmatpush1.bf16.msra.mxu0 %v448
    %1203 = vmatprep.subr.bf16.mxu0 %v452
    %1204 = vmatpush1.bf16.msra.mxu0 %v451
    %1205 = vmatprep.subr.bf16.mxu0 %v455
    %1206 = vmatpush1.bf16.msra.mxu0 %v454
    %1207 = vmatprep.subr.bf16.mxu0 %v458
    %1208 = vmatpush1.bf16.msra.mxu0 %v457
    %1209 = vmatprep.subr.bf16.mxu0 %v461
    %1210 = vmatpush1.bf16.msra.mxu0 %v460
    %1211 = vmatprep.subr.bf16.mxu0 0
    %1212 = vmatpush1.bf16.msra.mxu0 0
    %1213 = vmatprep.subr.bf16.mxu0 0
    %1214 = vmatpush1.bf16.msra.mxu0 0
    %1215 = vmatprep.subr.bf16.mxu0 0
    %1216 = vmatpush1.bf16.msra.mxu0 0
    %1217 = vmatprep.subr.bf16.mxu0 0
    %1218 = vmatpush1.bf16.msra.mxu0 0
    %1219 = vmatprep.subr.bf16.mxu0 0
    %1220 = vmatpush1.bf16.msra.mxu0 0
    %1221 = vmatprep.subr.bf16.mxu0 0
    %1222 = vmatpush1.bf16.msra.mxu0 0
    %1223 = vmatprep.subr.bf16.mxu0 0
    %1224 = vmatpush1.bf16.msra.mxu0 0
    %1225 = vmatprep.subr.bf16.mxu0 0
    %1226 = vmatpush1.bf16.msra.mxu0 0
    %1227 = vmatprep.mubr.bf16.mxu0 0
    %1228 = vmatmul.mubr.bf16.gmra.mrb[0].mxu0 %v1194
    %v1229 = vpop.f32.mrb[0].mxu0
    %v1230 = vadd.f32 0.0, %v1229
    %v1231 = vpop.f32.mrb[0].mxu0
    %v1232 = vadd.f32 0.0, %v1231
    %v1233 = vpop.f32.mrb[0].mxu0
    %v1234 = vpop.f32.mrb[0].mxu0
    %1235 = vdwg.mxu0
    %1236 = vmatprep.subr.bf16.mxu0 0
    %1237 = vmatpush1.bf16.msra.mxu0 %v441
    %1238 = vmatprep.subr.bf16.mxu0 0
    %1239 = vmatpush1.bf16.msra.mxu0 %v444
    %1240 = vmatprep.subr.bf16.mxu0 0
    %1241 = vmatpush1.bf16.msra.mxu0 %v447
    %1242 = vmatprep.subr.bf16.mxu0 0
    %1243 = vmatpush1.bf16.msra.mxu0 %v450
    %1244 = vmatprep.subr.bf16.mxu0 0
    %1245 = vmatpush1.bf16.msra.mxu0 %v453
    %1246 = vmatprep.subr.bf16.mxu0 0
    %1247 = vmatpush1.bf16.msra.mxu0 %v456
    %1248 = vmatprep.subr.bf16.mxu0 0
    %1249 = vmatpush1.bf16.msra.mxu0 %v459
    %1250 = vmatprep.subr.bf16.mxu0 0
    %1251 = vmatpush1.bf16.msra.mxu0 %v462
    %1252 = vmatprep.subr.bf16.mxu0 0
    %1253 = vmatpush1.bf16.msra.mxu0 0
    %1254 = vmatprep.subr.bf16.mxu0 0
    %1255 = vmatpush1.bf16.msra.mxu0 0
    %1256 = vmatprep.subr.bf16.mxu0 0
    %1257 = vmatpush1.bf16.msra.mxu0 0
    %1258 = vmatprep.subr.bf16.mxu0 0
    %1259 = vmatpush1.bf16.msra.mxu0 0
    %1260 = vmatprep.subr.bf16.mxu0 0
    %1261 = vmatpush1.bf16.msra.mxu0 0
    %1262 = vmatprep.subr.bf16.mxu0 0
    %1263 = vmatpush1.bf16.msra.mxu0 0
    %1264 = vmatprep.subr.bf16.mxu0 0
    %1265 = vmatpush1.bf16.msra.mxu0 0
    %1266 = vmatprep.subr.bf16.mxu0 0
    %1267 = vmatpush1.bf16.msra.mxu0 0
    %1268 = vmatprep.mubr.bf16.mxu0 0
    %1269 = vmatmul.mubr.bf16.gmra.mrb[0].mxu0 %v1194
    %v1270 = vpop.f32.mrb[0].mxu0
    %v1271 = vadd.f32 0.0, %v1270
    %v1272 = vpop.f32.mrb[0].mxu0
    %v1273 = vpop.f32.mrb[0].mxu0
    %v1274 = vpop.f32.mrb[0].mxu0
    %1275 = vdwg.mxu0
    %v1276 = vadd.f32 %v1191, %v1230
    %v1277 = vxor.u32 %v1276, 2147483648
    %v1278 = vmul.f32 %v1277, 1.442695
    %v1279 = vpow.pop %v1278
    %v1280 = vadd.f32 %v1279, 1.0
    %v1281 = vrcp.pop %v1280
    %v1282 = vmul.f32 1.0, %v1281
    %v1283 = vadd.f32 %v1192, %v1232
    %v1284 = vxor.u32 %v1283, 2147483648
    %v1285 = vmul.f32 %v1284, 1.442695
    %v1286 = vpow.pop %v1285
    %v1287 = vadd.f32 %v1286, 1.0
    %v1288 = vrcp.pop %v1287
    %v1289 = vmul.f32 1.0, %v1288
    %v1290 = vadd.f32 %v1271, %v586
    %v1291 = vmul.f32 %v1282, %v1290
    %v1292 = vadd.f32 %v1193, %v1291
    %v1293 = vtanh.pop %v1292
    %v1294 = vsub.f32 1.0, %v1289
    %v1295 = vmul.f32 %v1294, %v1293
    %v1296 = vmul.f32 %v1289, %v1187
    %v1297 = vadd.f32 %v1295, %v1296
    %vm1298 = vcmp.gt.s32.totalorder %v319, 6
    %v1299 = vsel %vm1298, 1, 0
    %1300 = vset.pattern.permute.xlu0 0
    %1301 = vperm.xlu0 %1300, %v1299
    %v1302 = vpop.permute.xlu0 %1301
    %vm1303 = vcmp.eq.s32.totalorder %v1302, 1
    %v1304 = vsel %vm1303, %v1297, %v1187
    %s1305 = smul.u32 7, 3
    %s1306 = smul.addr %s1305, 8
    %s1307 = scalar_lea.vmem [#allocation2], %s1306
    %v1308 = vld [vmem:[%s1307] sm:$0xff]
    %v1309 = vld [vmem:[%s1307 + $0x8] sm:$0xff]
    %v1310 = vld [vmem:[%s1307 + $0x10] sm:$0xff]
    %v1311 = vpack.c.bf16 %v1304, %v1304
    %1312 = vmatprep.subr.bf16.mxu0 %v440
    %1313 = vmatpush1.bf16.msra.mxu0 %v439
    %1314 = vmatprep.subr.bf16.mxu0 %v443
    %1315 = vmatpush1.bf16.msra.mxu0 %v442
    %1316 = vmatprep.subr.bf16.mxu0 %v446
    %1317 = vmatpush1.bf16.msra.mxu0 %v445
    %1318 = vmatprep.subr.bf16.mxu0 %v449
    %1319 = vmatpush1.bf16.msra.mxu0 %v448
    %1320 = vmatprep.subr.bf16.mxu0 %v452
    %1321 = vmatpush1.bf16.msra.mxu0 %v451
    %1322 = vmatprep.subr.bf16.mxu0 %v455
    %1323 = vmatpush1.bf16.msra.mxu0 %v454
    %1324 = vmatprep.subr.bf16.mxu0 %v458
    %1325 = vmatpush1.bf16.msra.mxu0 %v457
    %1326 = vmatprep.subr.bf16.mxu0 %v461
    %1327 = vmatpush1.bf16.msra.mxu0 %v460
    %1328 = vmatprep.subr.bf16.mxu0 0
    %1329 = vmatpush1.bf16.msra.mxu0 0
    %1330 = vmatprep.subr.bf16.mxu0 0
    %1331 = vmatpush1.bf16.msra.mxu0 0
    %1332 = vmatprep.subr.bf16.mxu0 0
    %1333 = vmatpush1.bf16.msra.mxu0 0
    %1334 = vmatprep.subr.bf16.mxu0 0
    %1335 = vmatpush1.bf16.msra.mxu0 0
    %1336 = vmatprep.subr.bf16.mxu0 0
    %1337 = vmatpush1.bf16.msra.mxu0 0
    %1338 = vmatprep.subr.bf16.mxu0 0
    %1339 = vmatpush1.bf16.msra.mxu0 0
    %1340 = vmatprep.subr.bf16.mxu0 0
    %1341 = vmatpush1.bf16.msra.mxu0 0
    %1342 = vmatprep.subr.bf16.mxu0 0
    %1343 = vmatpush1.bf16.msra.mxu0 0
    %1344 = vmatprep.mubr.bf16.mxu0 0
    %1345 = vmatmul.mubr.bf16.gmra.mrb[0].mxu0 %v1311
    %v1346 = vpop.f32.mrb[0].mxu0
    %v1347 = vadd.f32 0.0, %v1346
    %v1348 = vpop.f32.mrb[0].mxu0
    %v1349 = vadd.f32 0.0, %v1348
    %v1350 = vpop.f32.mrb[0].mxu0
    %v1351 = vpop.f32.mrb[0].mxu0
    %1352 = vdwg.mxu0
    %1353 = vmatprep.subr.bf16.mxu0 0
    %1354 = vmatpush1.bf16.msra.mxu0 %v441
    %1355 = vmatprep.subr.bf16.mxu0 0
    %1356 = vmatpush1.bf16.msra.mxu0 %v444
    %1357 = vmatprep.subr.bf16.mxu0 0
    %1358 = vmatpush1.bf16.msra.mxu0 %v447
    %1359 = vmatprep.subr.bf16.mxu0 0
    %1360 = vmatpush1.bf16.msra.mxu0 %v450
    %1361 = vmatprep.subr.bf16.mxu0 0
    %1362 = vmatpush1.bf16.msra.mxu0 %v453
    %1363 = vmatprep.subr.bf16.mxu0 0
    %1364 = vmatpush1.bf16.msra.mxu0 %v456
    %1365 = vmatprep.subr.bf16.mxu0 0
    %1366 = vmatpush1.bf16.msra.mxu0 %v459
    %1367 = vmatprep.subr.bf16.mxu0 0
    %1368 = vmatpush1.bf16.msra.mxu0 %v462
    %1369 = vmatprep.subr.bf16.mxu0 0
    %1370 = vmatpush1.bf16.msra.mxu0 0
    %1371 = vmatprep.subr.bf16.mxu0 0
    %1372 = vmatpush1.bf16.msra.mxu0 0
    %1373 = vmatprep.subr.bf16.mxu0 0
    %1374 = vmatpush1.bf16.msra.mxu0 0
    %1375 = vmatprep.subr.bf16.mxu0 0
    %1376 = vmatpush1.bf16.msra.mxu0 0
    %1377 = vmatprep.subr.bf16.mxu0 0
    %1378 = vmatpush1.bf16.msra.mxu0 0
    %1379 = vmatprep.subr.bf16.mxu0 0
    %1380 = vmatpush1.bf16.msra.mxu0 0
    %1381 = vmatprep.subr.bf16.mxu0 0
    %1382 = vmatpush1.bf16.msra.mxu0 0
    %1383 = vmatprep.subr.bf16.mxu0 0
    %1384 = vmatpush1.bf16.msra.mxu0 0
    %1385 = vmatprep.mubr.bf16.mxu0 0
    %1386 = vmatmul.mubr.bf16.gmra.mrb[0].mxu0 %v1311
    %v1387 = vpop.f32.mrb[0].mxu0
    %v1388 = vadd.f32 0.0, %v1387
    %v1389 = vpop.f32.mrb[0].mxu0
    %v1390 = vpop.f32.mrb[0].mxu0
    %v1391 = vpop.f32.mrb[0].mxu0
    %1392 = vdwg.mxu0
    %v1393 = vadd.f32 %v1308, %v1347
    %v1394 = vxor.u32 %v1393, 2147483648
    %v1395 = vmul.f32 %v1394, 1.442695
    %v1396 = vpow.pop %v1395
    %v1397 = vadd.f32 %v1396, 1.0
    %v1398 = vrcp.pop %v1397
    %v1399 = vmul.f32 1.0, %v1398
    %v1400 = vadd.f32 %v1309, %v1349
    %v1401 = vxor.u32 %v1400, 2147483648
    %v1402 = vmul.f32 %v1401, 1.442695
    %v1403 = vpow.pop %v1402
    %v1404 = vadd.f32 %v1403, 1.0
    %v1405 = vrcp.pop %v1404
    %v1406 = vmul.f32 1.0, %v1405
    %v1407 = vadd.f32 %v1388, %v586
    %v1408 = vmul.f32 %v1399, %v1407
    %v1409 = vadd.f32 %v1310, %v1408
    %v1410 = vtanh.pop %v1409
    %v1411 = vsub.f32 1.0, %v1406
    %v1412 = vmul.f32 %v1411, %v1410
    %v1413 = vmul.f32 %v1406, %v1304
    %v1414 = vadd.f32 %v1412, %v1413
    %vm1415 = vcmp.gt.s32.totalorder %v319, 7
    %v1416 = vsel %vm1415, 1, 0
    %1417 = vset.pattern.permute.xlu0 0
    %1418 = vperm.xlu0 %1417, %v1416
    %v1419 = vpop.permute.xlu0 %1418
    %vm1420 = vcmp.eq.s32.totalorder %v1419, 1
    %v1421 = vsel %vm1420, %v1414, %v1304
    %v1422 = vld [vmem:[#allocation6] sm:$0xff]
    %v1423 = vld [vmem:[#allocation6 + $0x8] sm:$0xff]
    %v1424 = vld [vmem:[#allocation6 + $0x10] sm:$0xff]
    %v1425 = vld [vmem:[#allocation6 + $0x18] sm:$0xff]
    %v1426 = vld [vmem:[#allocation6 + $0x20] sm:$0xff]
    %v1427 = vld [vmem:[#allocation6 + $0x28] sm:$0xff]
    %v1428 = vld [vmem:[#allocation6 + $0x30] sm:$0xff]
    %v1429 = vld [vmem:[#allocation6 + $0x38] sm:$0xff]
    %v1430 = vld [vmem:[#allocation6 + $0x40] sm:$0xff]
    %v1431 = vld [vmem:[#allocation6 + $0x48] sm:$0xff]
    %v1432 = vld [vmem:[#allocation6 + $0x50] sm:$0xff]
    %v1433 = vld [vmem:[#allocation6 + $0x58] sm:$0xff]
    %v1434 = vld [vmem:[#allocation6 + $0x60] sm:$0xff]
    %v1435 = vld [vmem:[#allocation6 + $0x68] sm:$0xff]
    %v1436 = vld [vmem:[#allocation6 + $0x70] sm:$0xff]
    %v1437 = vld [vmem:[#allocation6 + $0x78] sm:$0xff]
    %v1438 = vld [vmem:[%s7] sm:$0x1]
    %v1440 = vlaneseq
    %v1441 = vshrl.u32 %v1440, 7
    %v1442 = vsub.s32 0, %v1441
    %v1443 = vrot.slane %v1438, %v1442
    %1445 = vmatprep.subr.mxu0 0.0
    %1446 = vmatpush1.msra.mxu0 %v1422
    %1447 = vmatprep.subr.mxu0 0.0
    %1448 = vmatpush1.msra.mxu0 %v1423
    %1449 = vmatprep.subr.mxu0 0.0
    %1450 = vmatpush1.msra.mxu0 %v1424
    %1451 = vmatprep.subr.mxu0 0.0
    %1452 = vmatpush1.msra.mxu0 %v1425
    %1453 = vmatprep.subr.mxu0 0.0
    %1454 = vmatpush1.msra.mxu0 %v1426
    %1455 = vmatprep.subr.mxu0 0.0
    %1456 = vmatpush1.msra.mxu0 %v1427
    %1457 = vmatprep.subr.mxu0 0.0
    %1458 = vmatpush1.msra.mxu0 %v1428
    %1459 = vmatprep.subr.mxu0 0.0
    %1460 = vmatpush1.msra.mxu0 %v1429
    %1461 = vmatprep.subr.mxu0 0.0
    %1462 = vmatpush1.msra.mxu0 %v1430
    %1463 = vmatprep.subr.mxu0 0.0
    %1464 = vmatpush1.msra.mxu0 %v1431
    %1465 = vmatprep.subr.mxu0 0.0
    %1466 = vmatpush1.msra.mxu0 %v1432
    %1467 = vmatprep.subr.mxu0 0.0
    %1468 = vmatpush1.msra.mxu0 %v1433
    %1469 = vmatprep.subr.mxu0 0.0
    %1470 = vmatpush1.msra.mxu0 %v1434
    %1471 = vmatprep.subr.mxu0 0.0
    %1472 = vmatpush1.msra.mxu0 %v1435
    %1473 = vmatprep.subr.mxu0 0.0
    %1474 = vmatpush1.msra.mxu0 %v1436
    %1475 = vmatprep.subr.mxu0 0.0
    %1476 = vmatpush1.msra.mxu0 %v1437
    %1477 = vmatprep.subr.mxu0 0.0
    %1478 = vmatpush1.msra.mxu0 0.0
    %1479 = vmatprep.subr.mxu0 0.0
    %1480 = vmatpush1.msra.mxu0 0.0
    %1481 = vmatprep.subr.mxu0 0.0
    %1482 = vmatpush1.msra.mxu0 0.0
    %1483 = vmatprep.subr.mxu0 0.0
    %1484 = vmatpush1.msra.mxu0 0.0
    %1485 = vmatprep.subr.mxu0 0.0
    %1486 = vmatpush1.msra.mxu0 0.0
    %1487 = vmatprep.subr.mxu0 0.0
    %1488 = vmatpush1.msra.mxu0 0.0
    %1489 = vmatprep.subr.mxu0 0.0
    %1490 = vmatpush1.msra.mxu0 0.0
    %1491 = vmatprep.subr.mxu0 0.0
    %1492 = vmatpush1.msra.mxu0 0.0
    %1493 = vmatprep.subr.mxu0 0.0
    %1494 = vmatpush1.msra.mxu0 0.0
    %1495 = vmatprep.subr.mxu0 0.0
    %1496 = vmatpush1.msra.mxu0 0.0
    %1497 = vmatprep.subr.mxu0 0.0
    %1498 = vmatpush1.msra.mxu0 0.0
    %1499 = vmatprep.subr.mxu0 0.0
    %1500 = vmatpush1.msra.mxu0 0.0
    %1501 = vmatprep.subr.mxu0 0.0
    %1502 = vmatpush1.msra.mxu0 0.0
    %1503 = vmatprep.subr.mxu0 0.0
    %1504 = vmatpush1.msra.mxu0 0.0
    %1505 = vmatprep.subr.mxu0 0.0
    %1506 = vmatpush1.msra.mxu0 0.0
    %1507 = vmatprep.subr.mxu0 0.0
    %1508 = vmatpush1.msra.mxu0 0.0
    %1509 = vmatprep.mubr.f32.mxu0 0.0
    %1510 = vmatmul.mubr.f32.gmra.mrb[0].mxu0 %v1421
    %v1511 = vpop.f32.mrb[0].mxu0
    %v1512 = vadd.f32 %v1443, %v1511
    %v1513 = vpop.f32.mrb[0].mxu0
    %1514 = vdwg.mxu0
    %v1515 = vxor.u32 %v1512, 2147483648
    %v1516 = vmul.f32 %v1515, 1.442695
    %v1517 = vpow.pop %v1516
    %v1518 = vadd.f32 %v1517, 1.0
    %v1519 = vrcp.pop %v1518
    %v1520 = vmul.f32 1.0, %v1519
    %1521 = vst [vmem:[#allocation8] sm:$0xff] %v1520
    // Predicated region
    $region42: #{tpu_custom_call.1} parent=1 // pred_check
      _
    $region43: #{tpu_custom_call.1} parent=1 // pred_check_branch
      %1523 = sbr.rel (0) target = $region45
    $region44: #{tpu_custom_call.1} parent=1 // pred_region
      %s1525 = ssub.s32 128, 128
      %1526 = vsyncadd [#allocation5], %s1525
      %s1528 = sshll.u32 [#allocation8], 4
      %s1529 = int_to_ptr.vmem [resolvable:$true] %s1528
      %1531 = dma.vmem_to_hbm [thread:$0]  %s1529, 128, %s8, [#allocation5]
    $region45: #{tpu_custom_call.1} parent=1 // pred_fallthru
      _
    // Predicated region
    $region46: #{tpu_custom_call.1} parent=1 // pred_check
      _
    $region47: #{tpu_custom_call.1} parent=1 // pred_check_branch
      %1533 = sbr.rel (0) target = $region49
    $region48: #{tpu_custom_call.1} parent=1 // pred_region
      %1534 = dma.done [#allocation5], 128
    $region49: #{tpu_custom_call.1} parent=1 // pred_fallthru
      _
    %1535 = vsyncpa [#allocation4], 1
    %1536 = vsyncpa [#allocation7], 1
    %1537 = vsyncpa [#allocation5], 1

</llo_original>
